<compile_context>
chip_gen: v5e
topology: v5e:2x2
jax: 0.10.0
libtpu: 0.0.40
codegen_flags: <defaults>
</compile_context>

<pallas_src>
from collections import OrderedDict
import functools

import jax
import jax.numpy as jnp
from jax import lax
from jax.experimental import pallas as pl
from jax.experimental.pallas import tpu as pltpu


# ------------------------------ kernel helpers ------------------------------ #

def _layernorm(x, g, b, eps=1e-5):
    mu = jnp.mean(x, axis=-1, keepdims=True)
    var = jnp.mean(jnp.square(x - mu), axis=-1, keepdims=True)
    return (x - mu) * lax.rsqrt(var + eps) * g + b


def _softmax_exact(s):
    m = jnp.max(s, axis=-1, keepdims=True)
    e = jnp.exp(s - m)
    return e / jnp.sum(e, axis=-1, keepdims=True)


# ------------------------------- Pallas kernel ------------------------------ #

def _decoder_kernel(
    # inputs
    tgt_ref,                       # (B_blk, T, D)   bf16 target embeddings
    mem_ref,                       # (B_blk, S, D)   bf16 connector memory
    wg_ref,                        # (rows, D)       bf16 wout columns gathered at target ids
    bg_ref,                        # (rows, 1)       f32  bout gathered at target ids
    wqs_ref, wks_ref, wvs_ref, wos_ref,
    wqc_ref, wkc_ref, wvc_ref, woc_ref,
    g1_ref, b1_ref, g2_ref, b2_ref, g3_ref, b3_ref,
    w1_ref, w2_ref,
    wout_ref, bout_ref,            # (D, TILE_V) bf16, (1, TILE_V) f32
    # outputs
    hidden_ref,                    # (B_blk, T, D) bf16 final hidden states
    loss_ref,                      # (1, 1, 128)   f32 per-block CE sum (lane-dense)
    # scratch
    x_sc,                          # (rows, D) bf16 cached hidden state
    m_sc, l_sc,                    # (rows, 1) f32  online LSE state
    *, bf16_exp=True, ffn_chunk=2048,
):
    v_idx = pl.program_id(1)
    n_v = pl.num_programs(1)

    b_blk, T, D = tgt_ref.shape
    S = mem_ref.shape[1]
    rows = b_blk * T
    scale = 1.0 / (D ** 0.5)

    # NOTE: scratch reuse (x_sc / m_sc / l_sc) across the vocab axis relies on the
    # grid being (batch, vocab) with vocab innermost and megacore splitting only
    # the "parallel" batch axis.  Do not reorder the grid without revisiting this.

    # ---- transformer body: computed once per batch block (v == 0) ----
    @pl.when(v_idx == 0)
    def _transformer_body():
        x2 = tgt_ref[...].astype(jnp.float32).reshape(rows, D)     # f32 residual stream
        memb = mem_ref[...].reshape(b_blk * S, D)                  # bf16

        def mm(a_bf16, w):
            return jnp.dot(a_bf16, w, preferred_element_type=jnp.float32)

        # causal self-attention (single head), batch fused into M for projections
        xb = x2.astype(jnp.bfloat16)
        q = mm(xb, wqs_ref[...]).reshape(b_blk, T, D).astype(jnp.bfloat16)
        k = mm(xb, wks_ref[...]).reshape(b_blk, T, D).astype(jnp.bfloat16)
        v = mm(xb, wvs_ref[...]).reshape(b_blk, T, D).astype(jnp.bfloat16)
        s = jnp.einsum('bqd,bkd->bqk', q, k,
                       preferred_element_type=jnp.float32) * scale
        # single 2-D causal mask broadcast over batch (was per-block 3-D iotas)
        row_i = lax.broadcasted_iota(jnp.int32, (1, T, T), 1)
        col_i = lax.broadcasted_iota(jnp.int32, (1, T, T), 2)
        s = jnp.where(col_i <= row_i, s, -1e30)
        p = _softmax_exact(s).astype(jnp.bfloat16)
        ctx = jnp.einsum('bqk,bkd->bqd', p, v,
                         preferred_element_type=jnp.float32)
        sa = mm(ctx.reshape(rows, D).astype(jnp.bfloat16), wos_ref[...])
        x2 = _layernorm(x2 + sa, g1_ref[...], b1_ref[...])

        # cross-attention over connector memory
        xb = x2.astype(jnp.bfloat16)
        q = mm(xb, wqc_ref[...]).reshape(b_blk, T, D).astype(jnp.bfloat16)
        k = mm(memb, wkc_ref[...]).reshape(b_blk, S, D).astype(jnp.bfloat16)
        v = mm(memb, wvc_ref[...]).reshape(b_blk, S, D).astype(jnp.bfloat16)
        s = jnp.einsum('bqd,bkd->bqk', q, k,
                       preferred_element_type=jnp.float32) * scale
        p = _softmax_exact(s).astype(jnp.bfloat16)
        ctx = jnp.einsum('bqk,bkd->bqd', p, v,
                         preferred_element_type=jnp.float32)
        ca = mm(ctx.reshape(rows, D).astype(jnp.bfloat16), woc_ref[...])
        x2 = _layernorm(x2 + ca, g2_ref[...], b2_ref[...])

        # feed-forward: tiled over F; ReLU output fused straight to bf16
        xb = x2.astype(jnp.bfloat16)
        F = w1_ref.shape[1]
        h_acc = jnp.zeros((rows, D), jnp.float32)
        for f0 in range(0, F, ffn_chunk):
            fc = min(ffn_chunk, F - f0)
            hf = jnp.maximum(mm(xb, w1_ref[:, f0:f0 + fc]), 0.0).astype(jnp.bfloat16)
            h_acc = h_acc + mm(hf, w2_ref[f0:f0 + fc, :])
        x2 = _layernorm(x2 + h_acc, g3_ref[...], b3_ref[...])

        x2b = x2.astype(jnp.bfloat16)
        hidden_ref[...] = x2b.reshape(b_blk, T, D)   # hidden emitted in bf16
        x_sc[...] = x2b
        m_sc[...] = jnp.full_like(m_sc, -1e30)
        l_sc[...] = jnp.zeros_like(l_sc)

    # ---- LM head on this vocab tile + online log-sum-exp ----
    logits = jnp.dot(x_sc[...], wout_ref[...],
                     preferred_element_type=jnp.float32) + bout_ref[...]   # (rows, tile_v) f32

    m_old = m_sc[...]
    m_new = jnp.maximum(m_old, jnp.max(logits, axis=-1, keepdims=True))
    diff = logits - m_new
    if bf16_exp:
        # bf16 EUP exp (~2x throughput on v6e/v7x); f32 accumulation
        p_sum = jnp.sum(jnp.exp(diff.astype(jnp.bfloat16)),
                        axis=-1, keepdims=True, dtype=jnp.float32)
    else:
        p_sum = jnp.sum(jnp.exp(diff), axis=-1, keepdims=True)
    l_sc[...] = l_sc[...] * jnp.exp(m_old - m_new) + p_sum
    m_sc[...] = m_new

    @pl.when(v_idx == n_v - 1)
    def _finalize():
        # correct-class logit from wout columns gathered outside the kernel:
        # one (rows, D) rowwise dot per batch block, no per-vocab-tile gather.
        c = (jnp.sum(x_sc[...].astype(jnp.float32) * wg_ref[...].astype(jnp.float32),
                     axis=-1, keepdims=True) + bg_ref[...])
        token_loss = m_sc[...] + jnp.log(l_sc[...]) - c                    # (rows, 1)
        # TODO(synk): no ignore-index / pad-token masking (reference CE behaviour unknown).
        loss_ref[...] = jnp.sum(token_loss) * jnp.ones((1, 1, 128), jnp.float32)


# --------------------------- tiling / sizing helpers ------------------------ #

def _chip_knobs():
    """Per-chip tile / VMEM knobs. v7x-class (64 MiB VMEM, 2 TCs) vs v5e/v6e (128 MiB, 1 TC)."""
    kind = ""
    try:
        kind = jax.devices()[0].device_kind.lower()
    except Exception:
        pass
    vmem_phys = 128 * 1024 * 1024
    try:
        vmem_phys = int(pltpu.get_tpu_info().vmem_capacity_bytes)
    except Exception:
        pass
    two_tc = (vmem_phys <= 64 * 1024 * 1024) or ("v7" in kind)
    return {
        "min_batch_blocks": 2 if two_tc else 1,   # keep both v7x TensorCores busy
        "max_rows": 512 if two_tc else 1024,
        "tile_v": 1024 if two_tc else 2048,
        "ffn_chunk": 1024 if two_tc else 2048,
        "vmem_limit": int(min(max(vmem_phys - 8 * 1024 * 1024, 32 * 1024 * 1024),
                              (48 if two_tc else 100) * 1024 * 1024)),
        "bf16_exp": "v5" not in kind,             # v5e EUP has no bf16 path
    }


def _pick_batch_block(B, T, max_rows=1024, min_blocks=1):
    """Largest divisor of B with B_blk*T <= max_rows and at least min_blocks grid steps."""
    divs = [d for d in range(1, B + 1) if B % d == 0]
    cands = [d for d in divs if d * T <= max_rows and B // d >= min_blocks]
    if not cands:
        cands = [d for d in divs if d * T <= max_rows] or [1]
    return max(cands)


def _pad_and_tile_vocab(V, target=2048, align=128):
    """Return (V_padded, tile_v). Small V: single tile. Large V: 128-aligned tile, V padded up."""
    if V <= target:
        return V, V
    tile = max(align, (target // align) * align)
    v_pad = ((V + tile - 1) // tile) * tile
    return v_pad, tile


# ------------------------ one TransformerDecoder call ----------------------- #

_BODY_W = ('wqs', 'wks', 'wvs', 'wos', 'wqc', 'wkc', 'wvc', 'woc')
_LN_W = ('g1', 'b1', 'g2', 'b2', 'g3', 'b3')
_FFN_W = ('w1', 'w2')


def transformer_decoder_forward(params, tgt_ids, memory, enc_kwargs=None):
    """Returns (output_dict, losses_dict, kwargs) like TransformerDecoder.forward."""
    # TODO(synk): enc_kwargs usage inside the real TransformerDecoder is unknown; unused here.
    B, T = tgt_ids.shape
    S, D = memory.shape[1], memory.shape[2]
    V = params['wout'].shape[1]
    F = params['w1'].shape[1]

    knobs = _chip_knobs()
    b_blk = _pick_batch_block(B, T, knobs["max_rows"], knobs["min_batch_blocks"])
    v_pad, tile_v = _pad_and_tile_vocab(V, knobs["tile_v"])
    n_b = B // b_blk
    n_v = v_pad // tile_v
    rows = b_blk * T
    assert B % b_blk == 0 and v_pad % tile_v == 0

    # glue kept outside the kernel: embedding gather, target-column gather, bf16 casts
    ids_flat = tgt_ids.reshape(B * T).astype(jnp.int32)
    tgt_emb = jnp.take(params['embed'], tgt_ids, axis=0).astype(jnp.bfloat16)        # (B, T, D)
    mem_bf = memory.astype(jnp.bfloat16)                                             # (B, S, D)
    w_gather = jnp.take(params['wout'].T, ids_flat, axis=0).astype(jnp.bfloat16)     # (B*T, D)
    b_gather = params['bout'][0, ids_flat].reshape(B * T, 1).astype(jnp.float32)     # (B*T, 1)

    wout_bf = params['wout'].astype(jnp.bfloat16)
    bout = params['bout'].astype(jnp.float32)
    if v_pad > V:
        # pad vocab to a multiple of the tile: zero weights + -inf bias -> no effect on LSE
        wout_bf = jnp.pad(wout_bf, ((0, 0), (0, v_pad - V)))
        bout = jnp.pad(bout, ((0, 0), (0, v_pad - V)), constant_values=-1e30)

    mat_w = ([params[n].astype(jnp.bfloat16) for n in _BODY_W]
             + [params[n] for n in _LN_W]
             + [params[n].astype(jnp.bfloat16) for n in _FFN_W])

    def const_spec(w):
        # grid-invariant weight: constant block index => fetched once
        return pl.BlockSpec(w.shape, lambda b, v, _n=w.ndim: (0,) * _n)

    in_specs = (
        [pl.BlockSpec((b_blk, T, D), lambda b, v: (b, 0, 0)),
         pl.BlockSpec((b_blk, S, D), lambda b, v: (b, 0, 0)),
         pl.BlockSpec((rows, D), lambda b, v: (b, 0)),
         pl.BlockSpec((rows, 1), lambda b, v: (b, 0))]
        + [const_spec(w) for w in mat_w]
        + [pl.BlockSpec((D, tile_v), lambda b, v: (0, v)),
           pl.BlockSpec((1, tile_v), lambda b, v: (0, v))]
    )
    out_specs = [
        pl.BlockSpec((b_blk, T, D), lambda b, v: (b, 0, 0)),
        pl.BlockSpec((1, 1, 128), lambda b, v: (b, 0, 0)),
    ]
    out_shape = [
        jax.ShapeDtypeStruct((B, T, D), jnp.bfloat16),      # hidden in bf16 (halves writeback)
        jax.ShapeDtypeStruct((n_b, 1, 128), jnp.float32),   # lane-dense per-block loss
    ]

    flops = int(2 * B * T * D * D * 6 + 2 * B * S * D * D * 2
                + 4 * B * T * T * D + 4 * B * T * S * D
                + 4 * B * T * D * F + 2 * B * T * D * v_pad)
    transc = int(B * T * T + B * T * S + B * T * v_pad)
    bytes_acc = int(2 * (B * T * D + B * S * D + B * T * D) + 2 * B * T * D + 4 * B * T
                    + 2 * (8 * D * D + 2 * D * F + D * v_pad) + 4 * (6 * D + v_pad))

    kernel = functools.partial(
        _decoder_kernel,
        bf16_exp=knobs["bf16_exp"],
        ffn_chunk=max(1, min(knobs["ffn_chunk"], F)),
    )

    hidden, loss_blocks = pl.pallas_call(
        kernel,
        grid=(n_b, n_v),
        in_specs=in_specs,
        out_specs=out_specs,
        out_shape=out_shape,
        scratch_shapes=[
            pltpu.VMEM((rows, D), jnp.bfloat16),   # cached hidden state
            pltpu.VMEM((rows, 1), jnp.float32),    # running max
            pltpu.VMEM((rows, 1), jnp.float32),    # running sum-exp
        ],
        compiler_params=pltpu.CompilerParams(
            dimension_semantics=("parallel", "arbitrary"),
            vmem_limit_bytes=knobs["vmem_limit"],
        ),
        cost_estimate=pl.CostEstimate(
            flops=flops, transcendentals=transc, bytes_accessed=bytes_acc),
    )(tgt_emb, mem_bf, w_gather, b_gather, *mat_w, wout_bf, bout)

    decoder_loss = jnp.sum(loss_blocks[:, 0, 0]) / (B * T)   # mean token cross-entropy
    # TODO(synk): (B, T, V) logits intentionally not materialized (loss-only path);
    # they can be recovered as hidden @ wout + bout if a caller needs them.
    output_dict = {'hidden': hidden}
    losses_dict = {'decoder_loss': decoder_loss}
    kwargs = {}
    return output_dict, losses_dict, kwargs


# ------------------------------ parameter setup ----------------------------- #

def make_decoder_params(key, D, F, V):
    ks = jax.random.split(key, 12)

    def n(k, shape):
        return jax.random.normal(k, shape, jnp.float32) * 0.02

    return {
        'embed': n(ks[0], (V, D)),
        'wqs': n(ks[1], (D, D)), 'wks': n(ks[2], (D, D)),
        'wvs': n(ks[3], (D, D)), 'wos': n(ks[4], (D, D)),
        'wqc': n(ks[5], (D, D)), 'wkc': n(ks[6], (D, D)),
        'wvc': n(ks[7], (D, D)), 'woc': n(ks[8], (D, D)),
        'g1': jnp.ones((1, D), jnp.float32), 'b1': jnp.zeros((1, D), jnp.float32),
        'g2': jnp.ones((1, D), jnp.float32), 'b2': jnp.zeros((1, D), jnp.float32),
        'g3': jnp.ones((1, D), jnp.float32), 'b3': jnp.zeros((1, D), jnp.float32),
        'w1': n(ks[9], (D, F)), 'w2': n(ks[10], (F, D)),
        'wout': n(ks[11], (D, V)), 'bout': jnp.zeros((1, V), jnp.float32),
    }


# --------------------------------- Decoders --------------------------------- #

class Decoders:
    """JAX/Pallas port of model.decoders.Decoders (ModuleDict of transformer decoders)."""

    def __init__(self, decoder_keys, D, F, V):
        # TODO(synk): TransformerDecoder class body is not provided in the source;
        # each decoder is a synthesized single-layer decoder (see kernel above).
        self.decoder_dict = OrderedDict(
            (name, make_decoder_params(k, D, F, V)) for name, k in decoder_keys.items()
        )

    def forward(self, batch, connector_out_dict, enc_kwargs):
        decoders_output_dict = {}
        decoders_losses_dict = {}
        decoders_kwargs = {}
        total_loss = 0.0
        for decoder_name, params in self.decoder_dict.items():
            if decoder_name in connector_out_dict:
                connector_out = connector_out_dict[decoder_name]
                output_dict, losses_dict, kwargs = transformer_decoder_forward(
                    params, batch[decoder_name], connector_out, enc_kwargs)
                decoders_output_dict[decoder_name] = output_dict
                decoders_losses_dict[decoder_name] = losses_dict
                decoders_kwargs[decoder_name] = kwargs
                total_loss += losses_dict['decoder_loss'] * batch[decoder_name].shape[0]
        total_loss = total_loss / batch['imgs'].shape[0]
        return (total_loss, decoders_output_dict, decoders_losses_dict, decoders_kwargs)


# ----------------------------------- main ----------------------------------- #

if __name__ == "__main__":
    key = jax.random.PRNGKey(0)
    B, C, H, W = 2, 4, 16, 16         # imgs (NCHW, as in the PyTorch batch)
    T, S, D, F, V = 8, 8, 32, 64, 16  # target len, memory len, hidden, ffn, vocab

    k_img, k_cap, k_ocr, k_m1, k_m2, k_p1, k_p2 = jax.random.split(key, 7)

    batch = {
        'imgs': jax.random.normal(k_img, (B, C, H, W), jnp.float32),
        'caption': jax.random.randint(k_cap, (B, T), 0, V),
        'ocr': jax.random.randint(k_ocr, (B, T), 0, V),
    }
    connector_out_dict = {
        'caption': jax.random.normal(k_m1, (B, S, D), jnp.float32),
        'ocr': jax.random.normal(k_m2, (B, S, D), jnp.float32),
    }

    decoders = Decoders({'caption': k_p1, 'ocr': k_p2}, D=D, F=F, V=V)
    total_loss, out_dict, losses_dict, kwargs_dict = decoders.forward(
        batch, connector_out_dict, enc_kwargs={})

    jax.block_until_ready((total_loss, out_dict, losses_dict))
    assert jnp.isfinite(total_loss)
    print("KERNEL_OK")
</pallas_src>

<mosaic_0001>
module attributes {stable_mosaic.version = 11 : i64} {
  func.func @_decoder_kernel(%arg0: i32, %arg1: i32, %arg2: memref<2x8x32xbf16, #tpu.memory_space<vmem>>, %arg3: memref<2x8x32xbf16, #tpu.memory_space<vmem>>, %arg4: memref<16x32xbf16, #tpu.memory_space<vmem>>, %arg5: memref<16x1xf32, #tpu.memory_space<vmem>>, %arg6: memref<32x32xbf16, #tpu.memory_space<vmem>>, %arg7: memref<32x32xbf16, #tpu.memory_space<vmem>>, %arg8: memref<32x32xbf16, #tpu.memory_space<vmem>>, %arg9: memref<32x32xbf16, #tpu.memory_space<vmem>>, %arg10: memref<32x32xbf16, #tpu.memory_space<vmem>>, %arg11: memref<32x32xbf16, #tpu.memory_space<vmem>>, %arg12: memref<32x32xbf16, #tpu.memory_space<vmem>>, %arg13: memref<32x32xbf16, #tpu.memory_space<vmem>>, %arg14: memref<1x32xf32, #tpu.memory_space<vmem>>, %arg15: memref<1x32xf32, #tpu.memory_space<vmem>>, %arg16: memref<1x32xf32, #tpu.memory_space<vmem>>, %arg17: memref<1x32xf32, #tpu.memory_space<vmem>>, %arg18: memref<1x32xf32, #tpu.memory_space<vmem>>, %arg19: memref<1x32xf32, #tpu.memory_space<vmem>>, %arg20: memref<32x64xbf16, #tpu.memory_space<vmem>>, %arg21: memref<64x32xbf16, #tpu.memory_space<vmem>>, %arg22: memref<32x16xbf16, #tpu.memory_space<vmem>>, %arg23: memref<1x16xf32, #tpu.memory_space<vmem>>, %arg24: memref<2x8x32xbf16, #tpu.memory_space<vmem>>, %arg25: memref<1x1x128xf32, #tpu.memory_space<vmem>>, %arg26: memref<16x32xbf16, #tpu.memory_space<vmem>>, %arg27: memref<16x1xf32, #tpu.memory_space<vmem>>, %arg28: memref<16x1xf32, #tpu.memory_space<vmem>>) attributes {dimension_semantics = [#tpu.dimension_semantics<parallel>, #tpu.dimension_semantics<arbitrary>], iteration_bounds = array<i64: 1, 1>, scalar_prefetch = 0 : i64, scratch_operands = 3 : i64, tpu.core_type = #tpu.core_type<tc>, window_params = [{transform_indices = @transform_0, window_bounds = array<i64: 2, 8, 32>}, {transform_indices = @transform_1, window_bounds = array<i64: 2, 8, 32>}, {transform_indices = @transform_2, window_bounds = array<i64: 16, 32>}, {transform_indices = @transform_3, window_bounds = array<i64: 16, 1>}, {pipeline_mode = #tpu.pipeline_mode<synchronous>, transform_indices = @transform_4, window_bounds = array<i64: 32, 32>}, {pipeline_mode = #tpu.pipeline_mode<synchronous>, transform_indices = @transform_5, window_bounds = array<i64: 32, 32>}, {pipeline_mode = #tpu.pipeline_mode<synchronous>, transform_indices = @transform_6, window_bounds = array<i64: 32, 32>}, {pipeline_mode = #tpu.pipeline_mode<synchronous>, transform_indices = @transform_7, window_bounds = array<i64: 32, 32>}, {pipeline_mode = #tpu.pipeline_mode<synchronous>, transform_indices = @transform_8, window_bounds = array<i64: 32, 32>}, {pipeline_mode = #tpu.pipeline_mode<synchronous>, transform_indices = @transform_9, window_bounds = array<i64: 32, 32>}, {pipeline_mode = #tpu.pipeline_mode<synchronous>, transform_indices = @transform_10, window_bounds = array<i64: 32, 32>}, {pipeline_mode = #tpu.pipeline_mode<synchronous>, transform_indices = @transform_11, window_bounds = array<i64: 32, 32>}, {pipeline_mode = #tpu.pipeline_mode<synchronous>, transform_indices = @transform_12, window_bounds = array<i64: 1, 32>}, {pipeline_mode = #tpu.pipeline_mode<synchronous>, transform_indices = @transform_13, window_bounds = array<i64: 1, 32>}, {pipeline_mode = #tpu.pipeline_mode<synchronous>, transform_indices = @transform_14, window_bounds = array<i64: 1, 32>}, {pipeline_mode = #tpu.pipeline_mode<synchronous>, transform_indices = @transform_15, window_bounds = array<i64: 1, 32>}, {pipeline_mode = #tpu.pipeline_mode<synchronous>, transform_indices = @transform_16, window_bounds = array<i64: 1, 32>}, {pipeline_mode = #tpu.pipeline_mode<synchronous>, transform_indices = @transform_17, window_bounds = array<i64: 1, 32>}, {pipeline_mode = #tpu.pipeline_mode<synchronous>, transform_indices = @transform_18, window_bounds = array<i64: 32, 64>}, {pipeline_mode = #tpu.pipeline_mode<synchronous>, transform_indices = @transform_19, window_bounds = array<i64: 64, 32>}, {transform_indices = @transform_20, window_bounds = array<i64: 32, 16>}, {transform_indices = @transform_21, window_bounds = array<i64: 1, 16>}, {transform_indices = @transform_22, window_bounds = array<i64: 2, 8, 32>}, {transform_indices = @transform_23, window_bounds = array<i64: 1, 1, 128>}]} {
    %c0_i32 = arith.constant 0 : i32
    %0 = arith.cmpi eq, %arg1, %c0_i32 : i32
    %1 = arith.extui %0 : i1 to i32
    %c0_i32_0 = arith.constant 0 : i32
    %2 = arith.cmpi ne, %1, %c0_i32_0 : i32
    scf.if %2 {
      %c0_18 = arith.constant 0 : index
      %c0_19 = arith.constant 0 : index
      %c0_20 = arith.constant 0 : index
      %30 = vector.load %arg2[%c0_18, %c0_19, %c0_20] : memref<2x8x32xbf16, #tpu.memory_space<vmem>>, vector<2x8x32xbf16>
      %31 = arith.extf %30 : vector<2x8x32xbf16> to vector<2x8x32xf32>
      %32 = vector.shape_cast %31 : vector<2x8x32xf32> to vector<16x32xf32>
      %c0_21 = arith.constant 0 : index
      %c0_22 = arith.constant 0 : index
      %c0_23 = arith.constant 0 : index
      %33 = vector.load %arg3[%c0_21, %c0_22, %c0_23] : memref<2x8x32xbf16, #tpu.memory_space<vmem>>, vector<2x8x32xbf16>
      %34 = vector.shape_cast %33 : vector<2x8x32xbf16> to vector<16x32xbf16>
      %35 = arith.truncf %32 : vector<16x32xf32> to vector<16x32xbf16>
      %c0_24 = arith.constant 0 : index
      %c0_25 = arith.constant 0 : index
      %36 = vector.load %arg6[%c0_24, %c0_25] : memref<32x32xbf16, #tpu.memory_space<vmem>>, vector<32x32xbf16>
      %cst_26 = arith.constant dense<0.000000e+00> : vector<16x32xf32>
      %37 = tpu.matmul %35, %36, %cst_26 {dimension_numbers = #tpu.dot_dimension_numbers<[1], [0], [0], [1], [0, 0, 1, 1], [], []>} : vector<16x32xbf16>, vector<32x32xbf16>, vector<16x32xf32> -> vector<16x32xf32>
      %38 = vector.shape_cast %37 : vector<16x32xf32> to vector<2x8x32xf32>
      %39 = arith.truncf %38 : vector<2x8x32xf32> to vector<2x8x32xbf16>
      %c0_27 = arith.constant 0 : index
      %c0_28 = arith.constant 0 : index
      %40 = vector.load %arg7[%c0_27, %c0_28] : memref<32x32xbf16, #tpu.memory_space<vmem>>, vector<32x32xbf16>
      %cst_29 = arith.constant dense<0.000000e+00> : vector<16x32xf32>
      %41 = tpu.matmul %35, %40, %cst_29 {dimension_numbers = #tpu.dot_dimension_numbers<[1], [0], [0], [1], [0, 0, 1, 1], [], []>} : vector<16x32xbf16>, vector<32x32xbf16>, vector<16x32xf32> -> vector<16x32xf32>
      %42 = vector.shape_cast %41 : vector<16x32xf32> to vector<2x8x32xf32>
      %43 = arith.truncf %42 : vector<2x8x32xf32> to vector<2x8x32xbf16>
      %c0_30 = arith.constant 0 : index
      %c0_31 = arith.constant 0 : index
      %44 = vector.load %arg8[%c0_30, %c0_31] : memref<32x32xbf16, #tpu.memory_space<vmem>>, vector<32x32xbf16>
      %cst_32 = arith.constant dense<0.000000e+00> : vector<16x32xf32>
      %45 = tpu.matmul %35, %44, %cst_32 {dimension_numbers = #tpu.dot_dimension_numbers<[1], [0], [0], [1], [0, 0, 1, 1], [], []>} : vector<16x32xbf16>, vector<32x32xbf16>, vector<16x32xf32> -> vector<16x32xf32>
      %46 = vector.shape_cast %45 : vector<16x32xf32> to vector<2x8x32xf32>
      %47 = arith.truncf %46 : vector<2x8x32xf32> to vector<2x8x32xbf16>
      "tpu.trace_start"() <{level = 10 : i32, message = "bqd,bkd->bqk"}> : () -> ()
      %cst_33 = arith.constant dense<0.000000e+00> : vector<2x8x8xf32>
      %48 = tpu.matmul %39, %43, %cst_33 {dimension_numbers = #tpu.dot_dimension_numbers<[2], [2], [1], [1], [0, 0, 0, 1, 1, 1], [0], [0]>} : vector<2x8x32xbf16>, vector<2x8x32xbf16>, vector<2x8x8xf32> -> vector<2x8x8xf32>
      "tpu.trace_stop"() : () -> ()
      %cst_34 = arith.constant 0.176776692 : f32
      %49 = vector.broadcast %cst_34 : f32 to vector<2x8x8xf32>
      %50 = arith.mulf %48, %49 : vector<2x8x8xf32>
      %51 = tpu.iota {dimensions = array<i32: 1>} : vector<1x8x8xi32>
      %52 = tpu.iota {dimensions = array<i32: 2>} : vector<1x8x8xi32>
      %53 = arith.cmpi sle, %52, %51 : vector<1x8x8xi32>
      %cst_35 = arith.constant -1.000000e+30 : f32
      %54 = vector.shape_cast %53 : vector<1x8x8xi1> to vector<1x8x8xi1>
      %55 = vector.broadcast %54 : vector<1x8x8xi1> to vector<2x8x8xi1>
      %56 = vector.broadcast %cst_35 : f32 to vector<2x8x8xf32>
      %57 = arith.select %55, %50, %56 : vector<2x8x8xi1>, vector<2x8x8xf32>
      %cst_36 = arith.constant dense<0xFF800000> : vector<2x8xf32>
      %58 = vector.multi_reduction <maximumf>, %57, %cst_36 [2] : vector<2x8x8xf32> to vector<2x8xf32>
      %59 = vector.shape_cast %58 : vector<2x8xf32> to vector<2x8x1xf32>
      %60 = vector.broadcast %59 : vector<2x8x1xf32> to vector<2x8x8xf32>
      %61 = arith.subf %57, %60 : vector<2x8x8xf32>
      %62 = math.exp %61 : vector<2x8x8xf32>
      %cst_37 = arith.constant dense<0.000000e+00> : vector<2x8xf32>
      %63 = vector.multi_reduction <add>, %62, %cst_37 [2] : vector<2x8x8xf32> to vector<2x8xf32>
      %64 = vector.shape_cast %63 : vector<2x8xf32> to vector<2x8x1xf32>
      %65 = vector.broadcast %64 : vector<2x8x1xf32> to vector<2x8x8xf32>
      %66 = arith.divf %62, %65 : vector<2x8x8xf32>
      %67 = arith.truncf %66 : vector<2x8x8xf32> to vector<2x8x8xbf16>
      "tpu.trace_start"() <{level = 10 : i32, message = "bqk,bkd->bqd"}> : () -> ()
      %cst_38 = arith.constant dense<0.000000e+00> : vector<2x8x32xf32>
      %68 = tpu.matmul %67, %47, %cst_38 {dimension_numbers = #tpu.dot_dimension_numbers<[2], [1], [1], [2], [0, 0, 0, 1, 1, 2], [0], [0]>} : vector<2x8x8xbf16>, vector<2x8x32xbf16>, vector<2x8x32xf32> -> vector<2x8x32xf32>
      "tpu.trace_stop"() : () -> ()
      %69 = vector.shape_cast %68 : vector<2x8x32xf32> to vector<16x32xf32>
      %70 = arith.truncf %69 : vector<16x32xf32> to vector<16x32xbf16>
      %c0_39 = arith.constant 0 : index
      %c0_40 = arith.constant 0 : index
      %71 = vector.load %arg9[%c0_39, %c0_40] : memref<32x32xbf16, #tpu.memory_space<vmem>>, vector<32x32xbf16>
      %cst_41 = arith.constant dense<0.000000e+00> : vector<16x32xf32>
      %72 = tpu.matmul %70, %71, %cst_41 {dimension_numbers = #tpu.dot_dimension_numbers<[1], [0], [0], [1], [0, 0, 1, 1], [], []>} : vector<16x32xbf16>, vector<32x32xbf16>, vector<16x32xf32> -> vector<16x32xf32>
      %73 = arith.addf %32, %72 : vector<16x32xf32>
      %c0_42 = arith.constant 0 : index
      %c0_43 = arith.constant 0 : index
      %74 = vector.load %arg14[%c0_42, %c0_43] : memref<1x32xf32, #tpu.memory_space<vmem>>, vector<1x32xf32>
      %c0_44 = arith.constant 0 : index
      %c0_45 = arith.constant 0 : index
      %75 = vector.load %arg15[%c0_44, %c0_45] : memref<1x32xf32, #tpu.memory_space<vmem>>, vector<1x32xf32>
      %cst_46 = arith.constant dense<0.000000e+00> : vector<16xf32>
      %76 = vector.multi_reduction <add>, %73, %cst_46 [1] : vector<16x32xf32> to vector<16xf32>
      %77 = vector.shape_cast %76 : vector<16xf32> to vector<16x1xf32>
      %cst_47 = arith.constant 3.200000e+01 : f32
      %78 = vector.broadcast %cst_47 : f32 to vector<16x1xf32>
      %79 = arith.divf %77, %78 : vector<16x1xf32>
      %80 = vector.broadcast %79 : vector<16x1xf32> to vector<16x32xf32>
      %81 = arith.subf %73, %80 : vector<16x32xf32>
      %82 = arith.mulf %81, %81 : vector<16x32xf32>
      %cst_48 = arith.constant dense<0.000000e+00> : vector<16xf32>
      %83 = vector.multi_reduction <add>, %82, %cst_48 [1] : vector<16x32xf32> to vector<16xf32>
      %84 = vector.shape_cast %83 : vector<16xf32> to vector<16x1xf32>
      %cst_49 = arith.constant 3.200000e+01 : f32
      %85 = vector.broadcast %cst_49 : f32 to vector<16x1xf32>
      %86 = arith.divf %84, %85 : vector<16x1xf32>
      %87 = vector.broadcast %79 : vector<16x1xf32> to vector<16x32xf32>
      %88 = arith.subf %73, %87 : vector<16x32xf32>
      %cst_50 = arith.constant 9.99999974E-6 : f32
      %89 = vector.broadcast %cst_50 : f32 to vector<16x1xf32>
      %90 = arith.addf %86, %89 : vector<16x1xf32>
      %91 = math.rsqrt %90 : vector<16x1xf32>
      %92 = vector.broadcast %91 : vector<16x1xf32> to vector<16x32xf32>
      %93 = arith.mulf %88, %92 : vector<16x32xf32>
      %94 = vector.broadcast %74 : vector<1x32xf32> to vector<16x32xf32>
      %95 = arith.mulf %93, %94 : vector<16x32xf32>
      %96 = vector.broadcast %75 : vector<1x32xf32> to vector<16x32xf32>
      %97 = arith.addf %95, %96 : vector<16x32xf32>
      %98 = arith.truncf %97 : vector<16x32xf32> to vector<16x32xbf16>
      %c0_51 = arith.constant 0 : index
      %c0_52 = arith.constant 0 : index
      %99 = vector.load %arg10[%c0_51, %c0_52] : memref<32x32xbf16, #tpu.memory_space<vmem>>, vector<32x32xbf16>
      %cst_53 = arith.constant dense<0.000000e+00> : vector<16x32xf32>
      %100 = tpu.matmul %98, %99, %cst_53 {dimension_numbers = #tpu.dot_dimension_numbers<[1], [0], [0], [1], [0, 0, 1, 1], [], []>} : vector<16x32xbf16>, vector<32x32xbf16>, vector<16x32xf32> -> vector<16x32xf32>
      %101 = vector.shape_cast %100 : vector<16x32xf32> to vector<2x8x32xf32>
      %102 = arith.truncf %101 : vector<2x8x32xf32> to vector<2x8x32xbf16>
      %c0_54 = arith.constant 0 : index
      %c0_55 = arith.constant 0 : index
      %103 = vector.load %arg11[%c0_54, %c0_55] : memref<32x32xbf16, #tpu.memory_space<vmem>>, vector<32x32xbf16>
      %cst_56 = arith.constant dense<0.000000e+00> : vector<16x32xf32>
      %104 = tpu.matmul %34, %103, %cst_56 {dimension_numbers = #tpu.dot_dimension_numbers<[1], [0], [0], [1], [0, 0, 1, 1], [], []>} : vector<16x32xbf16>, vector<32x32xbf16>, vector<16x32xf32> -> vector<16x32xf32>
      %105 = vector.shape_cast %104 : vector<16x32xf32> to vector<2x8x32xf32>
      %106 = arith.truncf %105 : vector<2x8x32xf32> to vector<2x8x32xbf16>
      %c0_57 = arith.constant 0 : index
      %c0_58 = arith.constant 0 : index
      %107 = vector.load %arg12[%c0_57, %c0_58] : memref<32x32xbf16, #tpu.memory_space<vmem>>, vector<32x32xbf16>
      %cst_59 = arith.constant dense<0.000000e+00> : vector<16x32xf32>
      %108 = tpu.matmul %34, %107, %cst_59 {dimension_numbers = #tpu.dot_dimension_numbers<[1], [0], [0], [1], [0, 0, 1, 1], [], []>} : vector<16x32xbf16>, vector<32x32xbf16>, vector<16x32xf32> -> vector<16x32xf32>
      %109 = vector.shape_cast %108 : vector<16x32xf32> to vector<2x8x32xf32>
      %110 = arith.truncf %109 : vector<2x8x32xf32> to vector<2x8x32xbf16>
      "tpu.trace_start"() <{level = 10 : i32, message = "bqd,bkd->bqk"}> : () -> ()
      %cst_60 = arith.constant dense<0.000000e+00> : vector<2x8x8xf32>
      %111 = tpu.matmul %102, %106, %cst_60 {dimension_numbers = #tpu.dot_dimension_numbers<[2], [2], [1], [1], [0, 0, 0, 1, 1, 1], [0], [0]>} : vector<2x8x32xbf16>, vector<2x8x32xbf16>, vector<2x8x8xf32> -> vector<2x8x8xf32>
      "tpu.trace_stop"() : () -> ()
      %cst_61 = arith.constant 0.176776692 : f32
      %112 = vector.broadcast %cst_61 : f32 to vector<2x8x8xf32>
      %113 = arith.mulf %111, %112 : vector<2x8x8xf32>
      %cst_62 = arith.constant dense<0xFF800000> : vector<2x8xf32>
      %114 = vector.multi_reduction <maximumf>, %113, %cst_62 [2] : vector<2x8x8xf32> to vector<2x8xf32>
      %115 = vector.shape_cast %114 : vector<2x8xf32> to vector<2x8x1xf32>
      %116 = vector.broadcast %115 : vector<2x8x1xf32> to vector<2x8x8xf32>
      %117 = arith.subf %113, %116 : vector<2x8x8xf32>
      %118 = math.exp %117 : vector<2x8x8xf32>
      %cst_63 = arith.constant dense<0.000000e+00> : vector<2x8xf32>
      %119 = vector.multi_reduction <add>, %118, %cst_63 [2] : vector<2x8x8xf32> to vector<2x8xf32>
      %120 = vector.shape_cast %119 : vector<2x8xf32> to vector<2x8x1xf32>
      %121 = vector.broadcast %120 : vector<2x8x1xf32> to vector<2x8x8xf32>
      %122 = arith.divf %118, %121 : vector<2x8x8xf32>
      %123 = arith.truncf %122 : vector<2x8x8xf32> to vector<2x8x8xbf16>
      "tpu.trace_start"() <{level = 10 : i32, message = "bqk,bkd->bqd"}> : () -> ()
      %cst_64 = arith.constant dense<0.000000e+00> : vector<2x8x32xf32>
      %124 = tpu.matmul %123, %110, %cst_64 {dimension_numbers = #tpu.dot_dimension_numbers<[2], [1], [1], [2], [0, 0, 0, 1, 1, 2], [0], [0]>} : vector<2x8x8xbf16>, vector<2x8x32xbf16>, vector<2x8x32xf32> -> vector<2x8x32xf32>
      "tpu.trace_stop"() : () -> ()
      %125 = vector.shape_cast %124 : vector<2x8x32xf32> to vector<16x32xf32>
      %126 = arith.truncf %125 : vector<16x32xf32> to vector<16x32xbf16>
      %c0_65 = arith.constant 0 : index
      %c0_66 = arith.constant 0 : index
      %127 = vector.load %arg13[%c0_65, %c0_66] : memref<32x32xbf16, #tpu.memory_space<vmem>>, vector<32x32xbf16>
      %cst_67 = arith.constant dense<0.000000e+00> : vector<16x32xf32>
      %128 = tpu.matmul %126, %127, %cst_67 {dimension_numbers = #tpu.dot_dimension_numbers<[1], [0], [0], [1], [0, 0, 1, 1], [], []>} : vector<16x32xbf16>, vector<32x32xbf16>, vector<16x32xf32> -> vector<16x32xf32>
      %129 = arith.addf %97, %128 : vector<16x32xf32>
      %c0_68 = arith.constant 0 : index
      %c0_69 = arith.constant 0 : index
      %130 = vector.load %arg16[%c0_68, %c0_69] : memref<1x32xf32, #tpu.memory_space<vmem>>, vector<1x32xf32>
      %c0_70 = arith.constant 0 : index
      %c0_71 = arith.constant 0 : index
      %131 = vector.load %arg17[%c0_70, %c0_71] : memref<1x32xf32, #tpu.memory_space<vmem>>, vector<1x32xf32>
      %cst_72 = arith.constant dense<0.000000e+00> : vector<16xf32>
      %132 = vector.multi_reduction <add>, %129, %cst_72 [1] : vector<16x32xf32> to vector<16xf32>
      %133 = vector.shape_cast %132 : vector<16xf32> to vector<16x1xf32>
      %cst_73 = arith.constant 3.200000e+01 : f32
      %134 = vector.broadcast %cst_73 : f32 to vector<16x1xf32>
      %135 = arith.divf %133, %134 : vector<16x1xf32>
      %136 = vector.broadcast %135 : vector<16x1xf32> to vector<16x32xf32>
      %137 = arith.subf %129, %136 : vector<16x32xf32>
      %138 = arith.mulf %137, %137 : vector<16x32xf32>
      %cst_74 = arith.constant dense<0.000000e+00> : vector<16xf32>
      %139 = vector.multi_reduction <add>, %138, %cst_74 [1] : vector<16x32xf32> to vector<16xf32>
      %140 = vector.shape_cast %139 : vector<16xf32> to vector<16x1xf32>
      %cst_75 = arith.constant 3.200000e+01 : f32
      %141 = vector.broadcast %cst_75 : f32 to vector<16x1xf32>
      %142 = arith.divf %140, %141 : vector<16x1xf32>
      %143 = vector.broadcast %135 : vector<16x1xf32> to vector<16x32xf32>
      %144 = arith.subf %129, %143 : vector<16x32xf32>
      %cst_76 = arith.constant 9.99999974E-6 : f32
      %145 = vector.broadcast %cst_76 : f32 to vector<16x1xf32>
      %146 = arith.addf %142, %145 : vector<16x1xf32>
      %147 = math.rsqrt %146 : vector<16x1xf32>
      %148 = vector.broadcast %147 : vector<16x1xf32> to vector<16x32xf32>
      %149 = arith.mulf %144, %148 : vector<16x32xf32>
      %150 = vector.broadcast %130 : vector<1x32xf32> to vector<16x32xf32>
      %151 = arith.mulf %149, %150 : vector<16x32xf32>
      %152 = vector.broadcast %131 : vector<1x32xf32> to vector<16x32xf32>
      %153 = arith.addf %151, %152 : vector<16x32xf32>
      %154 = arith.truncf %153 : vector<16x32xf32> to vector<16x32xbf16>
      %cst_77 = arith.constant 0.000000e+00 : f32
      %155 = vector.broadcast %cst_77 : f32 to vector<16x32xf32>
      %c0_78 = arith.constant 0 : index
      %c0_79 = arith.constant 0 : index
      %156 = vector.load %arg20[%c0_78, %c0_79] : memref<32x64xbf16, #tpu.memory_space<vmem>>, vector<32x64xbf16>
      %cst_80 = arith.constant dense<0.000000e+00> : vector<16x64xf32>
      %157 = tpu.matmul %154, %156, %cst_80 {dimension_numbers = #tpu.dot_dimension_numbers<[1], [0], [0], [1], [0, 0, 1, 1], [], []>} : vector<16x32xbf16>, vector<32x64xbf16>, vector<16x64xf32> -> vector<16x64xf32>
      %cst_81 = arith.constant 0.000000e+00 : f32
      %158 = vector.broadcast %cst_81 : f32 to vector<16x64xf32>
      %159 = arith.maximumf %157, %158 : vector<16x64xf32>
      %160 = arith.truncf %159 : vector<16x64xf32> to vector<16x64xbf16>
      %c0_82 = arith.constant 0 : index
      %c0_83 = arith.constant 0 : index
      %161 = vector.load %arg21[%c0_82, %c0_83] : memref<64x32xbf16, #tpu.memory_space<vmem>>, vector<64x32xbf16>
      %cst_84 = arith.constant dense<0.000000e+00> : vector<16x32xf32>
      %162 = tpu.matmul %160, %161, %cst_84 {dimension_numbers = #tpu.dot_dimension_numbers<[1], [0], [0], [1], [0, 0, 1, 1], [], []>} : vector<16x64xbf16>, vector<64x32xbf16>, vector<16x32xf32> -> vector<16x32xf32>
      %163 = arith.addf %155, %162 : vector<16x32xf32>
      %164 = arith.addf %153, %163 : vector<16x32xf32>
      %c0_85 = arith.constant 0 : index
      %c0_86 = arith.constant 0 : index
      %165 = vector.load %arg18[%c0_85, %c0_86] : memref<1x32xf32, #tpu.memory_space<vmem>>, vector<1x32xf32>
      %c0_87 = arith.constant 0 : index
      %c0_88 = arith.constant 0 : index
      %166 = vector.load %arg19[%c0_87, %c0_88] : memref<1x32xf32, #tpu.memory_space<vmem>>, vector<1x32xf32>
      %cst_89 = arith.constant dense<0.000000e+00> : vector<16xf32>
      %167 = vector.multi_reduction <add>, %164, %cst_89 [1] : vector<16x32xf32> to vector<16xf32>
      %168 = vector.shape_cast %167 : vector<16xf32> to vector<16x1xf32>
      %cst_90 = arith.constant 3.200000e+01 : f32
      %169 = vector.broadcast %cst_90 : f32 to vector<16x1xf32>
      %170 = arith.divf %168, %169 : vector<16x1xf32>
      %171 = vector.broadcast %170 : vector<16x1xf32> to vector<16x32xf32>
      %172 = arith.subf %164, %171 : vector<16x32xf32>
      %173 = arith.mulf %172, %172 : vector<16x32xf32>
      %cst_91 = arith.constant dense<0.000000e+00> : vector<16xf32>
      %174 = vector.multi_reduction <add>, %173, %cst_91 [1] : vector<16x32xf32> to vector<16xf32>
      %175 = vector.shape_cast %174 : vector<16xf32> to vector<16x1xf32>
      %cst_92 = arith.constant 3.200000e+01 : f32
      %176 = vector.broadcast %cst_92 : f32 to vector<16x1xf32>
      %177 = arith.divf %175, %176 : vector<16x1xf32>
      %178 = vector.broadcast %170 : vector<16x1xf32> to vector<16x32xf32>
      %179 = arith.subf %164, %178 : vector<16x32xf32>
      %cst_93 = arith.constant 9.99999974E-6 : f32
      %180 = vector.broadcast %cst_93 : f32 to vector<16x1xf32>
      %181 = arith.addf %177, %180 : vector<16x1xf32>
      %182 = math.rsqrt %181 : vector<16x1xf32>
      %183 = vector.broadcast %182 : vector<16x1xf32> to vector<16x32xf32>
      %184 = arith.mulf %179, %183 : vector<16x32xf32>
      %185 = vector.broadcast %165 : vector<1x32xf32> to vector<16x32xf32>
      %186 = arith.mulf %184, %185 : vector<16x32xf32>
      %187 = vector.broadcast %166 : vector<1x32xf32> to vector<16x32xf32>
      %188 = arith.addf %186, %187 : vector<16x32xf32>
      %189 = arith.truncf %188 : vector<16x32xf32> to vector<16x32xbf16>
      %190 = vector.shape_cast %189 : vector<16x32xbf16> to vector<2x8x32xbf16>
      %c0_94 = arith.constant 0 : index
      %c0_95 = arith.constant 0 : index
      %c0_96 = arith.constant 0 : index
      %191 = vector.load %arg24[%c0_94, %c0_95, %c0_96] : memref<2x8x32xbf16, #tpu.memory_space<vmem>>, vector<2x8x32xbf16>
      tpu.vector_store %arg24[%c0_94, %c0_95, %c0_96], %190 {strides = array<i32>} : memref<2x8x32xbf16, #tpu.memory_space<vmem>>, vector<2x8x32xbf16>,
      %c0_97 = arith.constant 0 : index
      %c0_98 = arith.constant 0 : index
      %192 = vector.load %arg26[%c0_97, %c0_98] : memref<16x32xbf16, #tpu.memory_space<vmem>>, vector<16x32xbf16>
      tpu.vector_store %arg26[%c0_97, %c0_98], %189 {strides = array<i32>} : memref<16x32xbf16, #tpu.memory_space<vmem>>, vector<16x32xbf16>,
      %cst_99 = arith.constant -1.000000e+30 : f32
      %193 = vector.broadcast %cst_99 : f32 to vector<16x1xf32>
      %c0_100 = arith.constant 0 : index
      %c0_101 = arith.constant 0 : index
      %194 = vector.load %arg27[%c0_100, %c0_101] : memref<16x1xf32, #tpu.memory_space<vmem>>, vector<16x1xf32>
      tpu.vector_store %arg27[%c0_100, %c0_101], %193 {strides = array<i32>} : memref<16x1xf32, #tpu.memory_space<vmem>>, vector<16x1xf32>,
      %cst_102 = arith.constant 0.000000e+00 : f32
      %195 = vector.broadcast %cst_102 : f32 to vector<16x1xf32>
      %c0_103 = arith.constant 0 : index
      %c0_104 = arith.constant 0 : index
      %196 = vector.load %arg28[%c0_103, %c0_104] : memref<16x1xf32, #tpu.memory_space<vmem>>, vector<16x1xf32>
      tpu.vector_store %arg28[%c0_103, %c0_104], %195 {strides = array<i32>} : memref<16x1xf32, #tpu.memory_space<vmem>>, vector<16x1xf32>,
    } else {
    }
    %c0 = arith.constant 0 : index
    %c0_1 = arith.constant 0 : index
    %3 = vector.load %arg26[%c0, %c0_1] : memref<16x32xbf16, #tpu.memory_space<vmem>>, vector<16x32xbf16>
    %c0_2 = arith.constant 0 : index
    %c0_3 = arith.constant 0 : index
    %4 = vector.load %arg22[%c0_2, %c0_3] : memref<32x16xbf16, #tpu.memory_space<vmem>>, vector<32x16xbf16>
    %cst = arith.constant dense<0.000000e+00> : vector<16x16xf32>
    %5 = tpu.matmul %3, %4, %cst {dimension_numbers = #tpu.dot_dimension_numbers<[1], [0], [0], [1], [0, 0, 1, 1], [], []>} : vector<16x32xbf16>, vector<32x16xbf16>, vector<16x16xf32> -> vector<16x16xf32>
    %c0_4 = arith.constant 0 : index
    %c0_5 = arith.constant 0 : index
    %6 = vector.load %arg23[%c0_4, %c0_5] : memref<1x16xf32, #tpu.memory_space<vmem>>, vector<1x16xf32>
    %7 = vector.broadcast %6 : vector<1x16xf32> to vector<16x16xf32>
    %8 = arith.addf %5, %7 : vector<16x16xf32>
    %c0_6 = arith.constant 0 : index
    %c0_7 = arith.constant 0 : index
    %9 = vector.load %arg27[%c0_6, %c0_7] : memref<16x1xf32, #tpu.memory_space<vmem>>, vector<16x1xf32>
    %cst_8 = arith.constant dense<0xFF800000> : vector<16xf32>
    %10 = vector.multi_reduction <maximumf>, %8, %cst_8 [1] : vector<16x16xf32> to vector<16xf32>
    %11 = vector.shape_cast %10 : vector<16xf32> to vector<16x1xf32>
    %12 = arith.maximumf %9, %11 : vector<16x1xf32>
    %13 = vector.broadcast %12 : vector<16x1xf32> to vector<16x16xf32>
    %14 = arith.subf %8, %13 : vector<16x16xf32>
    %15 = arith.truncf %14 : vector<16x16xf32> to vector<16x16xbf16>
    %16 = math.exp %15 : vector<16x16xbf16>
    %17 = arith.extf %16 : vector<16x16xbf16> to vector<16x16xf32>
    %cst_9 = arith.constant dense<0.000000e+00> : vector<16xf32>
    %18 = vector.multi_reduction <add>, %17, %cst_9 [1] : vector<16x16xf32> to vector<16xf32>
    %19 = vector.shape_cast %18 : vector<16xf32> to vector<16x1xf32>
    %c0_10 = arith.constant 0 : index
    %c0_11 = arith.constant 0 : index
    %20 = vector.load %arg28[%c0_10, %c0_11] : memref<16x1xf32, #tpu.memory_space<vmem>>, vector<16x1xf32>
    %21 = arith.subf %9, %12 : vector<16x1xf32>
    %22 = math.exp %21 : vector<16x1xf32>
    %23 = arith.mulf %20, %22 : vector<16x1xf32>
    %24 = arith.addf %23, %19 : vector<16x1xf32>
    %c0_12 = arith.constant 0 : index
    %c0_13 = arith.constant 0 : index
    %25 = vector.load %arg28[%c0_12, %c0_13] : memref<16x1xf32, #tpu.memory_space<vmem>>, vector<16x1xf32>
    tpu.vector_store %arg28[%c0_12, %c0_13], %24 {strides = array<i32>} : memref<16x1xf32, #tpu.memory_space<vmem>>, vector<16x1xf32>,
    %c0_14 = arith.constant 0 : index
    %c0_15 = arith.constant 0 : index
    %26 = vector.load %arg27[%c0_14, %c0_15] : memref<16x1xf32, #tpu.memory_space<vmem>>, vector<16x1xf32>
    tpu.vector_store %arg27[%c0_14, %c0_15], %12 {strides = array<i32>} : memref<16x1xf32, #tpu.memory_space<vmem>>, vector<16x1xf32>,
    %c0_i32_16 = arith.constant 0 : i32
    %27 = arith.cmpi eq, %arg1, %c0_i32_16 : i32
    %28 = arith.extui %27 : i1 to i32
    %c0_i32_17 = arith.constant 0 : i32
    %29 = arith.cmpi ne, %28, %c0_i32_17 : i32
    scf.if %29 {
      %c0_18 = arith.constant 0 : index
      %c0_19 = arith.constant 0 : index
      %30 = vector.load %arg26[%c0_18, %c0_19] : memref<16x32xbf16, #tpu.memory_space<vmem>>, vector<16x32xbf16>
      %31 = arith.extf %30 : vector<16x32xbf16> to vector<16x32xf32>
      %c0_20 = arith.constant 0 : index
      %c0_21 = arith.constant 0 : index
      %32 = vector.load %arg4[%c0_20, %c0_21] : memref<16x32xbf16, #tpu.memory_space<vmem>>, vector<16x32xbf16>
      %33 = arith.extf %32 : vector<16x32xbf16> to vector<16x32xf32>
      %34 = arith.mulf %31, %33 : vector<16x32xf32>
      %cst_22 = arith.constant dense<0.000000e+00> : vector<16xf32>
      %35 = vector.multi_reduction <add>, %34, %cst_22 [1] : vector<16x32xf32> to vector<16xf32>
      %36 = vector.shape_cast %35 : vector<16xf32> to vector<16x1xf32>
      %c0_23 = arith.constant 0 : index
      %c0_24 = arith.constant 0 : index
      %37 = vector.load %arg5[%c0_23, %c0_24] : memref<16x1xf32, #tpu.memory_space<vmem>>, vector<16x1xf32>
      %38 = arith.addf %36, %37 : vector<16x1xf32>
      %c0_25 = arith.constant 0 : index
      %c0_26 = arith.constant 0 : index
      %39 = vector.load %arg27[%c0_25, %c0_26] : memref<16x1xf32, #tpu.memory_space<vmem>>, vector<16x1xf32>
      %c0_27 = arith.constant 0 : index
      %c0_28 = arith.constant 0 : index
      %40 = vector.load %arg28[%c0_27, %c0_28] : memref<16x1xf32, #tpu.memory_space<vmem>>, vector<16x1xf32>
      %41 = math.log %40 : vector<16x1xf32>
      %42 = arith.addf %39, %41 : vector<16x1xf32>
      %43 = arith.subf %42, %38 : vector<16x1xf32>
      %44 = vector.shape_cast %43 : vector<16x1xf32> to vector<1x16x1xf32>
      %cst_29 = arith.constant dense<0.000000e+00> : vector<1xf32>
      %45 = vector.multi_reduction <add>, %44, %cst_29 [1, 2] : vector<1x16x1xf32> to vector<1xf32>
      %46 = vector.shape_cast %45 : vector<1xf32> to vector<1x1x1xf32>
      %47 = vector.extract %46[0, 0, 0] : f32 from vector<1x1x1xf32>
      %cst_30 = arith.constant 1.000000e+00 : f32
      %48 = vector.broadcast %cst_30 : f32 to vector<1x1x128xf32>
      %49 = vector.broadcast %47 : f32 to vector<1x1x128xf32>
      %50 = arith.mulf %49, %48 : vector<1x1x128xf32>
      %c0_31 = arith.constant 0 : index
      %c0_32 = arith.constant 0 : index
      %c0_33 = arith.constant 0 : index
      %51 = vector.load %arg25[%c0_31, %c0_32, %c0_33] : memref<1x1x128xf32, #tpu.memory_space<vmem>>, vector<1x1x128xf32>
      tpu.vector_store %arg25[%c0_31, %c0_32, %c0_33], %50 {strides = array<i32>} : memref<1x1x128xf32, #tpu.memory_space<vmem>>, vector<1x1x128xf32>,
    } else {
    }
    return
  }
  func.func @transform_0(%arg0: i32, %arg1: i32) -> (i32, i32, i32) {
    %c0_i32 = arith.constant 0 : i32
    %c0_i32_0 = arith.constant 0 : i32
    %c0_i32_1 = arith.constant 0 : i32
    return %arg0, %c0_i32, %c0_i32_0 : i32, i32, i32
  }
  func.func @transform_1(%arg0: i32, %arg1: i32) -> (i32, i32, i32) {
    %c0_i32 = arith.constant 0 : i32
    %c0_i32_0 = arith.constant 0 : i32
    %c0_i32_1 = arith.constant 0 : i32
    return %arg0, %c0_i32, %c0_i32_0 : i32, i32, i32
  }
  func.func @transform_2(%arg0: i32, %arg1: i32) -> (i32, i32) {
    %c0_i32 = arith.constant 0 : i32
    %c0_i32_0 = arith.constant 0 : i32
    return %arg0, %c0_i32 : i32, i32
  }
  func.func @transform_3(%arg0: i32, %arg1: i32) -> (i32, i32) {
    %c0_i32 = arith.constant 0 : i32
    %c0_i32_0 = arith.constant 0 : i32
    return %arg0, %c0_i32 : i32, i32
  }
  func.func @transform_4(%arg0: i32, %arg1: i32) -> (i32, i32) {
    %c0_i32 = arith.constant 0 : i32
    %c0_i32_0 = arith.constant 0 : i32
    %c0_i32_1 = arith.constant 0 : i32
    return %c0_i32, %c0_i32_0 : i32, i32
  }
  func.func @transform_5(%arg0: i32, %arg1: i32) -> (i32, i32) {
    %c0_i32 = arith.constant 0 : i32
    %c0_i32_0 = arith.constant 0 : i32
    %c0_i32_1 = arith.constant 0 : i32
    return %c0_i32, %c0_i32_0 : i32, i32
  }
  func.func @transform_6(%arg0: i32, %arg1: i32) -> (i32, i32) {
    %c0_i32 = arith.constant 0 : i32
    %c0_i32_0 = arith.constant 0 : i32
    %c0_i32_1 = arith.constant 0 : i32
    return %c0_i32, %c0_i32_0 : i32, i32
  }
  func.func @transform_7(%arg0: i32, %arg1: i32) -> (i32, i32) {
    %c0_i32 = arith.constant 0 : i32
    %c0_i32_0 = arith.constant 0 : i32
    %c0_i32_1 = arith.constant 0 : i32
    return %c0_i32, %c0_i32_0 : i32, i32
  }
  func.func @transform_8(%arg0: i32, %arg1: i32) -> (i32, i32) {
    %c0_i32 = arith.constant 0 : i32
    %c0_i32_0 = arith.constant 0 : i32
    %c0_i32_1 = arith.constant 0 : i32
    return %c0_i32, %c0_i32_0 : i32, i32
  }
  func.func @transform_9(%arg0: i32, %arg1: i32) -> (i32, i32) {
    %c0_i32 = arith.constant 0 : i32
    %c0_i32_0 = arith.constant 0 : i32
    %c0_i32_1 = arith.constant 0 : i32
    return %c0_i32, %c0_i32_0 : i32, i32
  }
  func.func @transform_10(%arg0: i32, %arg1: i32) -> (i32, i32) {
    %c0_i32 = arith.constant 0 : i32
    %c0_i32_0 = arith.constant 0 : i32
    %c0_i32_1 = arith.constant 0 : i32
    return %c0_i32, %c0_i32_0 : i32, i32
  }
  func.func @transform_11(%arg0: i32, %arg1: i32) -> (i32, i32) {
    %c0_i32 = arith.constant 0 : i32
    %c0_i32_0 = arith.constant 0 : i32
    %c0_i32_1 = arith.constant 0 : i32
    return %c0_i32, %c0_i32_0 : i32, i32
  }
  func.func @transform_12(%arg0: i32, %arg1: i32) -> (i32, i32) {
    %c0_i32 = arith.constant 0 : i32
    %c0_i32_0 = arith.constant 0 : i32
    %c0_i32_1 = arith.constant 0 : i32
    return %c0_i32, %c0_i32_0 : i32, i32
  }
  func.func @transform_13(%arg0: i32, %arg1: i32) -> (i32, i32) {
    %c0_i32 = arith.constant 0 : i32
    %c0_i32_0 = arith.constant 0 : i32
    %c0_i32_1 = arith.constant 0 : i32
    return %c0_i32, %c0_i32_0 : i32, i32
  }
  func.func @transform_14(%arg0: i32, %arg1: i32) -> (i32, i32) {
    %c0_i32 = arith.constant 0 : i32
    %c0_i32_0 = arith.constant 0 : i32
    %c0_i32_1 = arith.constant 0 : i32
    return %c0_i32, %c0_i32_0 : i32, i32
  }
  func.func @transform_15(%arg0: i32, %arg1: i32) -> (i32, i32) {
    %c0_i32 = arith.constant 0 : i32
    %c0_i32_0 = arith.constant 0 : i32
    %c0_i32_1 = arith.constant 0 : i32
    return %c0_i32, %c0_i32_0 : i32, i32
  }
  func.func @transform_16(%arg0: i32, %arg1: i32) -> (i32, i32) {
    %c0_i32 = arith.constant 0 : i32
    %c0_i32_0 = arith.constant 0 : i32
    %c0_i32_1 = arith.constant 0 : i32
    return %c0_i32, %c0_i32_0 : i32, i32
  }
  func.func @transform_17(%arg0: i32, %arg1: i32) -> (i32, i32) {
    %c0_i32 = arith.constant 0 : i32
    %c0_i32_0 = arith.constant 0 : i32
    %c0_i32_1 = arith.constant 0 : i32
    return %c0_i32, %c0_i32_0 : i32, i32
  }
  func.func @transform_18(%arg0: i32, %arg1: i32) -> (i32, i32) {
    %c0_i32 = arith.constant 0 : i32
    %c0_i32_0 = arith.constant 0 : i32
    %c0_i32_1 = arith.constant 0 : i32
    return %c0_i32, %c0_i32_0 : i32, i32
  }
  func.func @transform_19(%arg0: i32, %arg1: i32) -> (i32, i32) {
    %c0_i32 = arith.constant 0 : i32
    %c0_i32_0 = arith.constant 0 : i32
    %c0_i32_1 = arith.constant 0 : i32
    return %c0_i32, %c0_i32_0 : i32, i32
  }
  func.func @transform_20(%arg0: i32, %arg1: i32) -> (i32, i32) {
    %c0_i32 = arith.constant 0 : i32
    %c0_i32_0 = arith.constant 0 : i32
    return %c0_i32, %arg1 : i32, i32
  }
  func.func @transform_21(%arg0: i32, %arg1: i32) -> (i32, i32) {
    %c0_i32 = arith.constant 0 : i32
    %c0_i32_0 = arith.constant 0 : i32
    return %c0_i32, %arg1 : i32, i32
  }
  func.func @transform_22(%arg0: i32, %arg1: i32) -> (i32, i32, i32) {
    %c0_i32 = arith.constant 0 : i32
    %c0_i32_0 = arith.constant 0 : i32
    %c0_i32_1 = arith.constant 0 : i32
    return %arg0, %c0_i32, %c0_i32_0 : i32, i32, i32
  }
  func.func @transform_23(%arg0: i32, %arg1: i32) -> (i32, i32, i32) {
    %c0_i32 = arith.constant 0 : i32
    %c0_i32_0 = arith.constant 0 : i32
    %c0_i32_1 = arith.constant 0 : i32
    return %arg0, %c0_i32, %c0_i32_0 : i32, i32, i32
  }
}

</mosaic_0001>

<llo_original>
// kernel: tpu_custom_call.1
$region0: #{tpu_custom_call.1}
  #allocation0 [shape = 'u32[]', space=smem, size = 0x4, offset = 0x4, fixed_abs, tag = 'smem constant byte address 0x4 - core index']
  #allocation1 [shape = 'u32[72,128]{1,0:T(1,128)}', space=vmem, size = 0x9000, scoped, tag = 'internal scratch']
  #allocation2 [shape = 'bf16[16,32]{1,0:T(8,128)(2,1)}', space=vmem, size = 0x1000, scoped, tag = 'scratch operand']
  #allocation3 [shape = 'f32[16,1]{1,0:T(8,128)}', space=vmem, size = 0x2000, scoped, tag = 'scratch operand']
  #allocation4 [shape = 'f32[16,1]{1,0:T(8,128)}', space=vmem, size = 0x2000, scoped, tag = 'scratch operand']
  %s0 = inlined_call_operand.hbm [shape: bf16[2,8,32], index: 0, kind: input, shape index: {}]
  %s1 = inlined_call_operand.hbm [shape: bf16[2,8,32], index: 1, kind: input, shape index: {}]
  %s2 = inlined_call_operand.hbm [shape: bf16[16,32], index: 2, kind: input, shape index: {}]
  %s3 = inlined_call_operand.vmem [shape: f32[16,1], index: 3, kind: input, shape index: {}]
  %s4 = inlined_call_operand.vmem [shape: bf16[32,32], index: 4, kind: input, shape index: {}]
  %s5 = inlined_call_operand.vmem [shape: bf16[32,32], index: 5, kind: input, shape index: {}]
  %s6 = inlined_call_operand.vmem [shape: bf16[32,32], index: 6, kind: input, shape index: {}]
  %s7 = inlined_call_operand.vmem [shape: bf16[32,32], index: 7, kind: input, shape index: {}]
  %s8 = inlined_call_operand.vmem [shape: bf16[32,32], index: 8, kind: input, shape index: {}]
  %s9 = inlined_call_operand.vmem [shape: bf16[32,32], index: 9, kind: input, shape index: {}]
  %s10 = inlined_call_operand.hbm [shape: bf16[32,32], index: 10, kind: input, shape index: {}]
  %s11 = inlined_call_operand.hbm [shape: bf16[32,32], index: 11, kind: input, shape index: {}]
  %s12 = inlined_call_operand.hbm [shape: f32[1,32], index: 12, kind: input, shape index: {}]
  %s13 = inlined_call_operand.hbm [shape: f32[1,32], index: 13, kind: input, shape index: {}]
  %s14 = inlined_call_operand.hbm [shape: f32[1,32], index: 14, kind: input, shape index: {}]
  %s15 = inlined_call_operand.hbm [shape: f32[1,32], index: 15, kind: input, shape index: {}]
  %s16 = inlined_call_operand.hbm [shape: f32[1,32], index: 16, kind: input, shape index: {}]
  %s17 = inlined_call_operand.hbm [shape: f32[1,32], index: 17, kind: input, shape index: {}]
  %s18 = inlined_call_operand.hbm [shape: bf16[32,64], index: 18, kind: input, shape index: {}]
  %s19 = inlined_call_operand.vmem [shape: bf16[64,32], index: 19, kind: input, shape index: {}]
  %s20 = inlined_call_operand.vmem [shape: bf16[32,16], index: 20, kind: input, shape index: {}]
  %s21 = inlined_call_operand.vmem [shape: f32[1,16], index: 21, kind: input, shape index: {}]
  %s22 = inlined_call_operand.hbm [shape: bf16[2,8,32], index: 22, kind: output, shape index: {0}]
  %s23 = inlined_call_operand.hbm [shape: f32[1,1,128], index: 23, kind: output, shape index: {1}]
  %24 = xla_tuple %s22, %s23
  %s25 = sld [smem:[#allocation0]]
  $region162: #{tpu_custom_call.1} parent=0
    _
  %s27 = ssub.s32 1, %s25
  %s28 = scalar_select 0, %s27, %s25
  $region1: #{tpu_custom_call.1} parent=0
    #allocation5 [shape = 'u8[4096]{0}', space=vmem, size = 0x1000, scoped, tag = 'input window, operand 0, single buffered']
    #allocation6 [shape = 's32[1]{0}', space=sflag, size = 0x4, scoped, tag = 'scoped memory for tpu_custom_call.1']
    #allocation7 [shape = 's32[1]{0}', space=sflag, size = 0x4, scoped, tag = 'scoped memory for tpu_custom_call.1']
    #allocation8 [shape = 'u8[4096]{0}', space=vmem, size = 0x1000, scoped, tag = 'input window, operand 1, single buffered']
    #allocation9 [shape = 's32[1]{0}', space=sflag, size = 0x4, scoped, tag = 'scoped memory for tpu_custom_call.1']
    #allocation10 [shape = 'u8[4096]{0}', space=vmem, size = 0x1000, scoped, tag = 'input window, operand 2, single buffered']
    #allocation11 [shape = 'u8[8192]{0}', space=vmem, size = 0x2000, scoped, tag = 'input window, operand 10, single buffered']
    #allocation12 [shape = 's32[1]{0}', space=sflag, size = 0x4, scoped, tag = 'scoped memory for tpu_custom_call.1']
    #allocation13 [shape = 'u8[8192]{0}', space=vmem, size = 0x2000, scoped, tag = 'input window, operand 11, single buffered']
    #allocation14 [shape = 'u8[512]{0}', space=vmem, size = 0x400, scoped, tag = 'input window, operand 12, single buffered']
    #allocation15 [shape = 's32[1]{0}', space=sflag, size = 0x4, scoped, tag = 'scoped memory for tpu_custom_call.1']
    #allocation16 [shape = 'u8[512]{0}', space=vmem, size = 0x400, scoped, tag = 'input window, operand 13, single buffered']
    #allocation17 [shape = 'u8[512]{0}', space=vmem, size = 0x400, scoped, tag = 'input window, operand 14, single buffered']
    #allocation18 [shape = 's32[1]{0}', space=sflag, size = 0x4, scoped, tag = 'scoped memory for tpu_custom_call.1']
    #allocation19 [shape = 'u8[512]{0}', space=vmem, size = 0x400, scoped, tag = 'input window, operand 15, single buffered']
    #allocation20 [shape = 'u8[512]{0}', space=vmem, size = 0x400, scoped, tag = 'input window, operand 16, single buffered']
    #allocation21 [shape = 's32[1]{0}', space=sflag, size = 0x4, scoped, tag = 'scoped memory for tpu_custom_call.1']
    #allocation22 [shape = 'u8[512]{0}', space=vmem, size = 0x400, scoped, tag = 'input window, operand 17, single buffered']
    #allocation23 [shape = 'u8[8192]{0}', space=vmem, size = 0x2000, scoped, tag = 'input window, operand 18, single buffered']
    #allocation24 [shape = 's32[1]{0}', space=sflag, size = 0x4, scoped, tag = 'scoped memory for tpu_custom_call.1']
    #allocation25 [shape = 'u8[4096]{0}', space=vmem, size = 0x1000, scoped, tag = 'output window, operand 0, single buffered']
    #allocation26 [shape = 'u8[512]{0}', space=vmem, size = 0x400, scoped, tag = 'output window, operand 1, single buffered']
    #allocation27 [shape = 's32[1]{0}', space=sflag, size = 0x4, scoped, tag = 'scoped memory for tpu_custom_call.1']
    %29 = vsyncpa [#allocation6], 0
    %30 = vsyncpa [#allocation9], 0
    %31 = vsyncpa [#allocation12], 0
    %32 = vsyncpa [#allocation15], 0
    %33 = vsyncpa [#allocation18], 0
    %34 = vsyncpa [#allocation21], 0
    %35 = vsyncpa [#allocation24], 0
    %36 = vsyncpa [#allocation7], 0
    %37 = vsyncpa [#allocation27], 0
    // Predicated region
    $region2: #{tpu_custom_call.1} parent=1 // pred_check
      _
    $region3: #{tpu_custom_call.1} parent=1 // pred_check_branch
      %39 = sbr.rel (0) target = $region5
    $region4: #{tpu_custom_call.1} parent=1 // pred_region
      %41 = vsyncadd [#allocation6], 0
      %s42 = sshll.u32 %s0, 4
      %s43 = int_to_ptr.hbm [resolvable:$true] %s42
      %s44 = sshll.u32 [#allocation5], 4
      %s45 = int_to_ptr.vmem [resolvable:$true] %s44
      %50 = dma.hbm_to_vmem [thread:$0]  %s43, 128, %s45, [#allocation6], 64, 64, 4
    $region5: #{tpu_custom_call.1} parent=1 // pred_fallthru
      _
    // Predicated region
    $region6: #{tpu_custom_call.1} parent=1 // pred_check
      _
    $region7: #{tpu_custom_call.1} parent=1 // pred_check_branch
      %52 = sbr.rel (0) target = $region9
    $region8: #{tpu_custom_call.1} parent=1 // pred_region
      %54 = vsyncadd [#allocation9], 0
      %s55 = sshll.u32 %s1, 4
      %s56 = int_to_ptr.hbm [resolvable:$true] %s55
      %s57 = sshll.u32 [#allocation8], 4
      %s58 = int_to_ptr.vmem [resolvable:$true] %s57
      %63 = dma.hbm_to_vmem [thread:$0]  %s56, 128, %s58, [#allocation9], 64, 64, 4
    $region9: #{tpu_custom_call.1} parent=1 // pred_fallthru
      _
    // Predicated region
    $region10: #{tpu_custom_call.1} parent=1 // pred_check
      _
    $region11: #{tpu_custom_call.1} parent=1 // pred_check_branch
      %65 = sbr.rel (0) target = $region13
    $region12: #{tpu_custom_call.1} parent=1 // pred_region
      %67 = vsyncadd [#allocation9], 0
      %s68 = sshll.u32 %s2, 4
      %s69 = int_to_ptr.hbm [resolvable:$true] %s68
      %s70 = sshll.u32 [#allocation10], 4
      %s71 = int_to_ptr.vmem [resolvable:$true] %s70
      %76 = dma.hbm_to_vmem [thread:$0]  %s69, 128, %s71, [#allocation9], 64, 64, 4
    $region13: #{tpu_custom_call.1} parent=1 // pred_fallthru
      _
    // Predicated region
    $region14: #{tpu_custom_call.1} parent=1 // pred_check
      _
    $region15: #{tpu_custom_call.1} parent=1 // pred_check_branch
      %78 = sbr.rel (0) target = $region17
    $region16: #{tpu_custom_call.1} parent=1 // pred_region
      _
    $region17: #{tpu_custom_call.1} parent=1 // pred_fallthru
      _
    // Predicated region
    $region18: #{tpu_custom_call.1} parent=1 // pred_check
      _
    $region19: #{tpu_custom_call.1} parent=1 // pred_check_branch
      %80 = sbr.rel (0) target = $region21
    $region20: #{tpu_custom_call.1} parent=1 // pred_region
      _
    $region21: #{tpu_custom_call.1} parent=1 // pred_fallthru
      _
    // Predicated region
    $region22: #{tpu_custom_call.1} parent=1 // pred_check
      _
    $region23: #{tpu_custom_call.1} parent=1 // pred_check_branch
      %82 = sbr.rel (0) target = $region25
    $region24: #{tpu_custom_call.1} parent=1 // pred_region
      _
    $region25: #{tpu_custom_call.1} parent=1 // pred_fallthru
      _
    // Predicated region
    $region26: #{tpu_custom_call.1} parent=1 // pred_check
      _
    $region27: #{tpu_custom_call.1} parent=1 // pred_check_branch
      %84 = sbr.rel (0) target = $region29
    $region28: #{tpu_custom_call.1} parent=1 // pred_region
      _
    $region29: #{tpu_custom_call.1} parent=1 // pred_fallthru
      _
    // Predicated region
    $region30: #{tpu_custom_call.1} parent=1 // pred_check
      _
    $region31: #{tpu_custom_call.1} parent=1 // pred_check_branch
      %86 = sbr.rel (0) target = $region33
    $region32: #{tpu_custom_call.1} parent=1 // pred_region
      _
    $region33: #{tpu_custom_call.1} parent=1 // pred_fallthru
      _
    // Predicated region
    $region34: #{tpu_custom_call.1} parent=1 // pred_check
      _
    $region35: #{tpu_custom_call.1} parent=1 // pred_check_branch
      %88 = sbr.rel (0) target = $region37
    $region36: #{tpu_custom_call.1} parent=1 // pred_region
      _
    $region37: #{tpu_custom_call.1} parent=1 // pred_fallthru
      _
    // Predicated region
    $region38: #{tpu_custom_call.1} parent=1 // pred_check
      _
    $region39: #{tpu_custom_call.1} parent=1 // pred_check_branch
      %90 = sbr.rel (0) target = $region41
    $region40: #{tpu_custom_call.1} parent=1 // pred_region
      _
    $region41: #{tpu_custom_call.1} parent=1 // pred_fallthru
      _
    // Predicated region
    $region42: #{tpu_custom_call.1} parent=1 // pred_check
      _
    $region43: #{tpu_custom_call.1} parent=1 // pred_check_branch
      %92 = sbr.rel (0) target = $region45
    $region44: #{tpu_custom_call.1} parent=1 // pred_region
      %94 = vsyncadd [#allocation12], 0
      %s95 = sshll.u32 %s10, 4
      %s96 = int_to_ptr.hbm [resolvable:$true] %s95
      %s97 = sshll.u32 [#allocation11], 4
      %s98 = int_to_ptr.vmem [resolvable:$true] %s97
      %103 = dma.hbm_to_vmem [thread:$0]  %s96, 256, %s98, [#allocation12], 64, 64, 4
    $region45: #{tpu_custom_call.1} parent=1 // pred_fallthru
      _
    // Predicated region
    $region46: #{tpu_custom_call.1} parent=1 // pred_check
      _
    $region47: #{tpu_custom_call.1} parent=1 // pred_check_branch
      %105 = sbr.rel (0) target = $region49
    $region48: #{tpu_custom_call.1} parent=1 // pred_region
      %107 = vsyncadd [#allocation12], 0
      %s108 = sshll.u32 %s11, 4
      %s109 = int_to_ptr.hbm [resolvable:$true] %s108
      %s110 = sshll.u32 [#allocation13], 4
      %s111 = int_to_ptr.vmem [resolvable:$true] %s110
      %116 = dma.hbm_to_vmem [thread:$0]  %s109, 256, %s111, [#allocation12], 64, 64, 4
    $region49: #{tpu_custom_call.1} parent=1 // pred_fallthru
      _
    // Predicated region
    $region50: #{tpu_custom_call.1} parent=1 // pred_check
      _
    $region51: #{tpu_custom_call.1} parent=1 // pred_check_branch
      %118 = sbr.rel (0) target = $region53
    $region52: #{tpu_custom_call.1} parent=1 // pred_region
      %120 = vsyncadd [#allocation15], 0
      %s122 = sshll.u32 %s12, 4
      %s123 = int_to_ptr.hbm [resolvable:$true] %s122
      %s124 = sshll.u32 [#allocation14], 4
      %s125 = int_to_ptr.vmem [resolvable:$true] %s124
      %127 = dma.hbm_to_vmem [thread:$0]  %s123, 16, %s125, [#allocation15]
    $region53: #{tpu_custom_call.1} parent=1 // pred_fallthru
      _
    // Predicated region
    $region54: #{tpu_custom_call.1} parent=1 // pred_check
      _
    $region55: #{tpu_custom_call.1} parent=1 // pred_check_branch
      %129 = sbr.rel (0) target = $region57
    $region56: #{tpu_custom_call.1} parent=1 // pred_region
      %131 = vsyncadd [#allocation15], 0
      %s133 = sshll.u32 %s13, 4
      %s134 = int_to_ptr.hbm [resolvable:$true] %s133
      %s135 = sshll.u32 [#allocation16], 4
      %s136 = int_to_ptr.vmem [resolvable:$true] %s135
      %138 = dma.hbm_to_vmem [thread:$0]  %s134, 16, %s136, [#allocation15]
    $region57: #{tpu_custom_call.1} parent=1 // pred_fallthru
      _
    // Predicated region
    $region58: #{tpu_custom_call.1} parent=1 // pred_check
      _
    $region59: #{tpu_custom_call.1} parent=1 // pred_check_branch
      %140 = sbr.rel (0) target = $region61
    $region60: #{tpu_custom_call.1} parent=1 // pred_region
      %142 = vsyncadd [#allocation18], 0
      %s144 = sshll.u32 %s14, 4
      %s145 = int_to_ptr.hbm [resolvable:$true] %s144
      %s146 = sshll.u32 [#allocation17], 4
      %s147 = int_to_ptr.vmem [resolvable:$true] %s146
      %149 = dma.hbm_to_vmem [thread:$0]  %s145, 16, %s147, [#allocation18]
    $region61: #{tpu_custom_call.1} parent=1 // pred_fallthru
      _
    // Predicated region
    $region62: #{tpu_custom_call.1} parent=1 // pred_check
      _
    $region63: #{tpu_custom_call.1} parent=1 // pred_check_branch
      %151 = sbr.rel (0) target = $region65
    $region64: #{tpu_custom_call.1} parent=1 // pred_region
      %153 = vsyncadd [#allocation18], 0
      %s155 = sshll.u32 %s15, 4
      %s156 = int_to_ptr.hbm [resolvable:$true] %s155
      %s157 = sshll.u32 [#allocation19], 4
      %s158 = int_to_ptr.vmem [resolvable:$true] %s157
      %160 = dma.hbm_to_vmem [thread:$0]  %s156, 16, %s158, [#allocation18]
    $region65: #{tpu_custom_call.1} parent=1 // pred_fallthru
      _
    // Predicated region
    $region66: #{tpu_custom_call.1} parent=1 // pred_check
      _
    $region67: #{tpu_custom_call.1} parent=1 // pred_check_branch
      %162 = sbr.rel (0) target = $region69
    $region68: #{tpu_custom_call.1} parent=1 // pred_region
      %164 = vsyncadd [#allocation21], 0
      %s166 = sshll.u32 %s16, 4
      %s167 = int_to_ptr.hbm [resolvable:$true] %s166
      %s168 = sshll.u32 [#allocation20], 4
      %s169 = int_to_ptr.vmem [resolvable:$true] %s168
      %171 = dma.hbm_to_vmem [thread:$0]  %s167, 16, %s169, [#allocation21]
    $region69: #{tpu_custom_call.1} parent=1 // pred_fallthru
      _
    // Predicated region
    $region70: #{tpu_custom_call.1} parent=1 // pred_check
      _
    $region71: #{tpu_custom_call.1} parent=1 // pred_check_branch
      %173 = sbr.rel (0) target = $region73
    $region72: #{tpu_custom_call.1} parent=1 // pred_region
      %175 = vsyncadd [#allocation21], 0
      %s177 = sshll.u32 %s17, 4
      %s178 = int_to_ptr.hbm [resolvable:$true] %s177
      %s179 = sshll.u32 [#allocation22], 4
      %s180 = int_to_ptr.vmem [resolvable:$true] %s179
      %182 = dma.hbm_to_vmem [thread:$0]  %s178, 16, %s180, [#allocation21]
    $region73: #{tpu_custom_call.1} parent=1 // pred_fallthru
      _
    // Predicated region
    $region74: #{tpu_custom_call.1} parent=1 // pred_check
      _
    $region75: #{tpu_custom_call.1} parent=1 // pred_check_branch
      %184 = sbr.rel (0) target = $region77
    $region76: #{tpu_custom_call.1} parent=1 // pred_region
      %186 = vsyncadd [#allocation24], 0
      %s187 = sshll.u32 %s18, 4
      %s188 = int_to_ptr.hbm [resolvable:$true] %s187
      %s189 = sshll.u32 [#allocation23], 4
      %s190 = int_to_ptr.vmem [resolvable:$true] %s189
      %195 = dma.hbm_to_vmem [thread:$0]  %s188, 256, %s190, [#allocation24], 64, 64, 4
    $region77: #{tpu_custom_call.1} parent=1 // pred_fallthru
      _
    // Predicated region
    $region78: #{tpu_custom_call.1} parent=1 // pred_check
      _
    $region79: #{tpu_custom_call.1} parent=1 // pred_check_branch
      %197 = sbr.rel (0) target = $region81
    $region80: #{tpu_custom_call.1} parent=1 // pred_region
      _
    $region81: #{tpu_custom_call.1} parent=1 // pred_fallthru
      _
    // Predicated region
    $region82: #{tpu_custom_call.1} parent=1 // pred_check
      _
    $region83: #{tpu_custom_call.1} parent=1 // pred_check_branch
      %199 = sbr.rel (0) target = $region85
    $region84: #{tpu_custom_call.1} parent=1 // pred_region
      _
    $region85: #{tpu_custom_call.1} parent=1 // pred_fallthru
      _
    // Predicated region
    $region86: #{tpu_custom_call.1} parent=1 // pred_check
      _
    $region87: #{tpu_custom_call.1} parent=1 // pred_check_branch
      %201 = sbr.rel (0) target = $region89
    $region88: #{tpu_custom_call.1} parent=1 // pred_region
      _
    $region89: #{tpu_custom_call.1} parent=1 // pred_fallthru
      _
    // Predicated region
    $region90: #{tpu_custom_call.1} parent=1 // pred_check
      _
    $region91: #{tpu_custom_call.1} parent=1 // pred_check_branch
      %203 = sbr.rel (0) target = $region93
    $region92: #{tpu_custom_call.1} parent=1 // pred_region
      %205 = dma.done [#allocation6], 128
    $region93: #{tpu_custom_call.1} parent=1 // pred_fallthru
      _
    // Predicated region
    $region94: #{tpu_custom_call.1} parent=1 // pred_check
      _
    $region95: #{tpu_custom_call.1} parent=1 // pred_check_branch
      %207 = sbr.rel (0) target = $region97
    $region96: #{tpu_custom_call.1} parent=1 // pred_region
      %209 = dma.done [#allocation9], 128
    $region97: #{tpu_custom_call.1} parent=1 // pred_fallthru
      _
    // Predicated region
    $region98: #{tpu_custom_call.1} parent=1 // pred_check
      _
    $region99: #{tpu_custom_call.1} parent=1 // pred_check_branch
      %211 = sbr.rel (0) target = $region101
    $region100: #{tpu_custom_call.1} parent=1 // pred_region
      %213 = dma.done [#allocation9], 128
    $region101: #{tpu_custom_call.1} parent=1 // pred_fallthru
      _
    // Predicated region
    $region102: #{tpu_custom_call.1} parent=1 // pred_check
      _
    $region103: #{tpu_custom_call.1} parent=1 // pred_check_branch
      %215 = sbr.rel (0) target = $region105
    $region104: #{tpu_custom_call.1} parent=1 // pred_region
      %217 = dma.done [#allocation12], 256
    $region105: #{tpu_custom_call.1} parent=1 // pred_fallthru
      _
    // Predicated region
    $region106: #{tpu_custom_call.1} parent=1 // pred_check
      _
    $region107: #{tpu_custom_call.1} parent=1 // pred_check_branch
      %219 = sbr.rel (0) target = $region109
    $region108: #{tpu_custom_call.1} parent=1 // pred_region
      %221 = dma.done [#allocation12], 256
    $region109: #{tpu_custom_call.1} parent=1 // pred_fallthru
      _
    // Predicated region
    $region110: #{tpu_custom_call.1} parent=1 // pred_check
      _
    $region111: #{tpu_custom_call.1} parent=1 // pred_check_branch
      %223 = sbr.rel (0) target = $region113
    $region112: #{tpu_custom_call.1} parent=1 // pred_region
      %225 = dma.done [#allocation15], 16
    $region113: #{tpu_custom_call.1} parent=1 // pred_fallthru
      _
    // Predicated region
    $region114: #{tpu_custom_call.1} parent=1 // pred_check
      _
    $region115: #{tpu_custom_call.1} parent=1 // pred_check_branch
      %227 = sbr.rel (0) target = $region117
    $region116: #{tpu_custom_call.1} parent=1 // pred_region
      %229 = dma.done [#allocation15], 16
    $region117: #{tpu_custom_call.1} parent=1 // pred_fallthru
      _
    // Predicated region
    $region118: #{tpu_custom_call.1} parent=1 // pred_check
      _
    $region119: #{tpu_custom_call.1} parent=1 // pred_check_branch
      %231 = sbr.rel (0) target = $region121
    $region120: #{tpu_custom_call.1} parent=1 // pred_region
      %233 = dma.done [#allocation18], 16
    $region121: #{tpu_custom_call.1} parent=1 // pred_fallthru
      _
    // Predicated region
    $region122: #{tpu_custom_call.1} parent=1 // pred_check
      _
    $region123: #{tpu_custom_call.1} parent=1 // pred_check_branch
      %235 = sbr.rel (0) target = $region125
    $region124: #{tpu_custom_call.1} parent=1 // pred_region
      %237 = dma.done [#allocation18], 16
    $region125: #{tpu_custom_call.1} parent=1 // pred_fallthru
      _
    // Predicated region
    $region126: #{tpu_custom_call.1} parent=1 // pred_check
      _
    $region127: #{tpu_custom_call.1} parent=1 // pred_check_branch
      %239 = sbr.rel (0) target = $region129
    $region128: #{tpu_custom_call.1} parent=1 // pred_region
      %241 = dma.done [#allocation21], 16
    $region129: #{tpu_custom_call.1} parent=1 // pred_fallthru
      _
    // Predicated region
    $region130: #{tpu_custom_call.1} parent=1 // pred_check
      _
    $region131: #{tpu_custom_call.1} parent=1 // pred_check_branch
      %243 = sbr.rel (0) target = $region133
    $region132: #{tpu_custom_call.1} parent=1 // pred_region
      %245 = dma.done [#allocation21], 16
    $region133: #{tpu_custom_call.1} parent=1 // pred_fallthru
      _
    // Predicated region
    $region134: #{tpu_custom_call.1} parent=1 // pred_check
      _
    $region135: #{tpu_custom_call.1} parent=1 // pred_check_branch
      %247 = sbr.rel (0) target = $region137
    $region136: #{tpu_custom_call.1} parent=1 // pred_region
      %249 = dma.done [#allocation24], 256
    $region137: #{tpu_custom_call.1} parent=1 // pred_fallthru
      _
    %p251 = scmp.eq.s32.totalorder 0, 0
    // Predicated region
    $region138: #{tpu_custom_call.1} parent=1 // pred_check
      %p252 = pneg %p251
    $region139: #{tpu_custom_call.1} parent=1 // pred_check_branch
      %254 = sbr.rel (%p252) target = $region141
    $region140: #{tpu_custom_call.1} parent=1 // pred_region
      %v255 = vld [vmem:[#allocation5] sm:$0xf]
      %v256 = vld [vmem:[#allocation5 + $0x4] sm:$0xf]
      %v257 = vunpack.c.l.bf16 %v255
      %v258 = vunpack.c.l.bf16 %v256
      %v259 = vld [vmem:[#allocation8] sm:$0xf]
      %v260 = vld [vmem:[#allocation8 + $0x4] sm:$0xf]
      %v261 = vpack.c.bf16 %v258, %v257
      %v262 = vld [vmem:[%s4] sm:$0xf]
      %v263 = vld [vmem:[%s4 + $0x4] sm:$0xf]
      %v264 = vld [vmem:[%s4 + $0x8] sm:$0xf]
      %v265 = vld [vmem:[%s4 + $0xc] sm:$0xf]
      %v270 = vunpack.c.l.b16 %v262
      %v271 = vunpack.c.l.b16 %v263
      %v272 = vunpack.c.l.b16 %v264
      %v273 = vunpack.c.l.b16 %v265
      %v274 = vpack.c.b16 %v271, %v270
      %v275 = vpack.c.b16 %v273, %v272
      %vm278 = vcmask 261120
      %v280 = vsel %vm278, %v261, 0
      %282 = vmatpush.bf16.msra.mxu0 0
      %283 = vmatpush.bf16.msra.mxu0 0
      %284 = vmatpush.bf16.msra.mxu0 0
      %285 = vmatpush.bf16.msra.mxu0 0
      %286 = vmatpush.bf16.msra.mxu0 0
      %287 = vmatpush.bf16.msra.mxu0 0
      %288 = vmatpush.bf16.msra.mxu0 %v275
      %289 = vmatpush.bf16.msra.mxu0 %v274
      %290 = vmatmul.bf16.gmra.mxu0 %v280
      %v291 = vpop.f32.mrf.mxu0
      %v292 = vadd.f32 0.0, %v291
      %v293 = vpop.f32.mrf.mxu0
      %v294 = vadd.f32 0.0, %v293
      %295 = vdwg.mxu0
      %v296 = vpack.c.bf16 %v292, %v292
      %v297 = vpack.c.bf16 %v294, %v294
      %v298 = vld [vmem:[%s5] sm:$0xf]
      %v299 = vld [vmem:[%s5 + $0x4] sm:$0xf]
      %v300 = vld [vmem:[%s5 + $0x8] sm:$0xf]
      %v301 = vld [vmem:[%s5 + $0xc] sm:$0xf]
      %v306 = vunpack.c.l.b16 %v298
      %v307 = vunpack.c.l.b16 %v299
      %v308 = vunpack.c.l.b16 %v300
      %v309 = vunpack.c.l.b16 %v301
      %v310 = vpack.c.b16 %v307, %v306
      %v311 = vpack.c.b16 %v309, %v308
      %314 = vmatpush.bf16.msra.mxu0 0
      %315 = vmatpush.bf16.msra.mxu0 0
      %316 = vmatpush.bf16.msra.mxu0 0
      %317 = vmatpush.bf16.msra.mxu0 0
      %318 = vmatpush.bf16.msra.mxu0 0
      %319 = vmatpush.bf16.msra.mxu0 0
      %320 = vmatpush.bf16.msra.mxu0 %v311
      %321 = vmatpush.bf16.msra.mxu0 %v310
      %322 = vmatmul.bf16.gmra.mxu0 %v280
      %v323 = vpop.f32.mrf.mxu0
      %v324 = vadd.f32 0.0, %v323
      %v325 = vpop.f32.mrf.mxu0
      %v326 = vadd.f32 0.0, %v325
      %327 = vdwg.mxu0
      %v328 = vpack.c.bf16 %v324, %v324
      %v329 = vpack.c.bf16 %v326, %v326
      %v330 = vld [vmem:[%s6] sm:$0xf]
      %v331 = vld [vmem:[%s6 + $0x4] sm:$0xf]
      %v332 = vld [vmem:[%s6 + $0x8] sm:$0xf]
      %v333 = vld [vmem:[%s6 + $0xc] sm:$0xf]
      %v338 = vunpack.c.l.b16 %v330
      %v339 = vunpack.c.l.b16 %v331
      %v340 = vunpack.c.l.b16 %v332
      %v341 = vunpack.c.l.b16 %v333
      %v342 = vpack.c.b16 %v339, %v338
      %v343 = vpack.c.b16 %v341, %v340
      %346 = vmatpush.bf16.msra.mxu0 0
      %347 = vmatpush.bf16.msra.mxu0 0
      %348 = vmatpush.bf16.msra.mxu0 0
      %349 = vmatpush.bf16.msra.mxu0 0
      %350 = vmatpush.bf16.msra.mxu0 0
      %351 = vmatpush.bf16.msra.mxu0 0
      %352 = vmatpush.bf16.msra.mxu0 %v343
      %353 = vmatpush.bf16.msra.mxu0 %v342
      %354 = vmatmul.bf16.gmra.mxu0 %v280
      %v355 = vpop.f32.mrf.mxu0
      %v356 = vadd.f32 0.0, %v355
      %v357 = vpop.f32.mrf.mxu0
      %v358 = vadd.f32 0.0, %v357
      %359 = vdwg.mxu0
      %v360 = vpack.c.bf16 %v356, %v356
      %v361 = vpack.c.bf16 %v358, %v358
      %v363 = vsel %vm278, %v296, 0
      %v366 = vsel %vm278, %v328, 0
      %368 = vmatpush.bf16.xpose.msra.mxu0 0
      %369 = vmatpush.bf16.xpose.msra.mxu0 0
      %370 = vmatpush.bf16.xpose.msra.mxu0 0
      %371 = vmatpush.bf16.xpose.msra.mxu0 0
      %372 = vmatpush.bf16.xpose.msra.mxu0 0
      %373 = vmatpush.bf16.xpose.msra.mxu0 0
      %374 = vmatpush.bf16.xpose.msra.mxu0 0
      %375 = vmatpush.bf16.xpose.msra.mxu0 %v366
      %376 = vmatmul.bf16.gmra.mxu0 %v363
      %v377 = vpop.f32.mrf.mxu0
      %v378 = vadd.f32 0.0, %v377
      %v379 = vpop.f32.mrf.mxu0
      %380 = vdwg.mxu0
      %v382 = vsel %vm278, %v297, 0
      %v385 = vsel %vm278, %v329, 0
      %387 = vmatpush.bf16.xpose.msra.mxu0 0
      %388 = vmatpush.bf16.xpose.msra.mxu0 0
      %389 = vmatpush.bf16.xpose.msra.mxu0 0
      %390 = vmatpush.bf16.xpose.msra.mxu0 0
      %391 = vmatpush.bf16.xpose.msra.mxu0 0
      %392 = vmatpush.bf16.xpose.msra.mxu0 0
      %393 = vmatpush.bf16.xpose.msra.mxu0 0
      %394 = vmatpush.bf16.xpose.msra.mxu0 %v385
      %395 = vmatmul.bf16.gmra.mxu0 %v382
      %v396 = vpop.f32.mrf.mxu0
      %v397 = vadd.f32 0.0, %v396
      %v398 = vpop.f32.mrf.mxu0
      %399 = vdwg.mxu0
      %v400 = vmul.f32 %v378, 0.17677669
      %v401 = vmul.f32 %v397, 0.17677669
      %v402 = vlaneseq
      %v403 = vshrl.u32 %v402, 7
      %v404 = vlaneseq
      %v405 = vand.u32 %v404, 127
      %vm406 = vcmp.le.s32.totalorder %v405, %v403
      %v407 = vsel %vm406, 1, 0
      %vm408 = vcmp.eq.s32.totalorder %v407, 1
      %v409 = vsel %vm408, %v400, -1e+30
      %v410 = vsel %vm408, %v401, -1e+30
      %vm411 = vcmask 64512
      %v412 = vsel %vm411, %v409, -inf
      %413 = vmax.xlane.f32.xlu0 %v412
      %v414 = vpop.xlane.xlu0 %413
      %v415 = vsel %vm411, %v410, -inf
      %416 = vmax.xlane.f32.xlu0 %v415
      %v417 = vpop.xlane.xlu0 %416
      %v418 = vsub.f32 %v409, %v414
      %v419 = vsub.f32 %v410, %v417
      %v420 = vmul.f32 %v418, 1.442695
      %v421 = vpow.pop %v420
      %v422 = vmul.f32 %v419, 1.442695
      %v423 = vpow.pop %v422
      %v424 = vsel %vm411, %v421, 0.0
      %425 = vadd.xlane.f32.xlu0 %v424
      %v426 = vpop.xlane.xlu0 %425
      %v427 = vsel %vm411, %v423, 0.0
      %428 = vadd.xlane.f32.xlu0 %v427
      %v429 = vpop.xlane.xlu0 %428
      %v430 = vrcp.pop %v426
      %v431 = vmul.f32 %v426, %v430
      %v432 = vsub.f32 1.0, %v431
      %v433 = vmul.f32 %v430, %v432
      %v434 = vadd.f32 %v430, %v433
      %vm435 = vweird.f32 %v426
      %vm436 = vweird.f32 %v430
      %vm437 = vmor %vm435, %vm436
      %v438 = vsel %vm437, %v430, %v434
      %v439 = vand.u32 2147483647, %v426
      %vm440 = vcmp.eq.f32.partialorder %v439, 8.507059e+37
      %v441 = vand.u32 %v426, 2147483648
      %v442 = vor.u32 1.1754944e-38, %v441
      %v443 = vsel %vm440, %v442, %v438
      %v444 = vmul.f32 %v421, %v443
      %v445 = vrcp.pop %v429
      %v446 = vmul.f32 %v429, %v445
      %v447 = vsub.f32 1.0, %v446
      %v448 = vmul.f32 %v445, %v447
      %v449 = vadd.f32 %v445, %v448
      %vm450 = vweird.f32 %v429
      %vm451 = vweird.f32 %v445
      %vm452 = vmor %vm450, %vm451
      %v453 = vsel %vm452, %v445, %v449
      %v454 = vand.u32 2147483647, %v429
      %vm455 = vcmp.eq.f32.partialorder %v454, 8.507059e+37
      %v456 = vand.u32 %v429, 2147483648
      %v457 = vor.u32 1.1754944e-38, %v456
      %v458 = vsel %vm455, %v457, %v453
      %v459 = vmul.f32 %v423, %v458
      %v460 = vpack.c.bf16 %v444, %v444
      %v461 = vpack.c.bf16 %v459, %v459
      %v463 = vsel %vm411, %v460, 0
      %vm465 = vcmask 1043456
      %v467 = vsel %vm465, %v360, 0
      %469 = vmatpush.bf16.msra.mxu0 0
      %470 = vmatpush.bf16.msra.mxu0 0
      %471 = vmatpush.bf16.msra.mxu0 0
      %472 = vmatpush.bf16.msra.mxu0 0
      %473 = vmatpush.bf16.msra.mxu0 0
      %474 = vmatpush.bf16.msra.mxu0 0
      %475 = vmatpush.bf16.msra.mxu0 0
      %476 = vmatpush.bf16.msra.mxu0 %v467
      %477 = vmatmul.bf16.gmra.mxu0 %v463
      %v478 = vpop.f32.mrf.mxu0
      %v479 = vadd.f32 0.0, %v478
      %v480 = vpop.f32.mrf.mxu0
      %481 = vdwg.mxu0
      %v483 = vsel %vm411, %v461, 0
      %v486 = vsel %vm465, %v361, 0
      %488 = vmatpush.bf16.msra.mxu0 0
      %489 = vmatpush.bf16.msra.mxu0 0
      %490 = vmatpush.bf16.msra.mxu0 0
      %491 = vmatpush.bf16.msra.mxu0 0
      %492 = vmatpush.bf16.msra.mxu0 0
      %493 = vmatpush.bf16.msra.mxu0 0
      %494 = vmatpush.bf16.msra.mxu0 0
      %495 = vmatpush.bf16.msra.mxu0 %v486
      %496 = vmatmul.bf16.gmra.mxu0 %v483
      %v497 = vpop.f32.mrf.mxu0
      %v498 = vadd.f32 0.0, %v497
      %v499 = vpop.f32.mrf.mxu0
      %500 = vdwg.mxu0
      %v501 = vpack.c.bf16 %v498, %v479
      %v502 = vld [vmem:[%s7] sm:$0xf]
      %v503 = vld [vmem:[%s7 + $0x4] sm:$0xf]
      %v504 = vld [vmem:[%s7 + $0x8] sm:$0xf]
      %v505 = vld [vmem:[%s7 + $0xc] sm:$0xf]
      %v510 = vunpack.c.l.b16 %v502
      %v511 = vunpack.c.l.b16 %v503
      %v512 = vunpack.c.l.b16 %v504
      %v513 = vunpack.c.l.b16 %v505
      %v514 = vpack.c.b16 %v511, %v510
      %v515 = vpack.c.b16 %v513, %v512
      %v519 = vsel %vm278, %v501, 0
      %521 = vmatpush.bf16.msra.mxu0 0
      %522 = vmatpush.bf16.msra.mxu0 0
      %523 = vmatpush.bf16.msra.mxu0 0
      %524 = vmatpush.bf16.msra.mxu0 0
      %525 = vmatpush.bf16.msra.mxu0 0
      %526 = vmatpush.bf16.msra.mxu0 0
      %527 = vmatpush.bf16.msra.mxu0 %v515
      %528 = vmatpush.bf16.msra.mxu0 %v514
      %529 = vmatmul.bf16.gmra.mxu0 %v519
      %v530 = vpop.f32.mrf.mxu0
      %v531 = vadd.f32 0.0, %v530
      %v532 = vpop.f32.mrf.mxu0
      %v533 = vadd.f32 0.0, %v532
      %534 = vdwg.mxu0
      %v535 = vadd.f32 %v257, %v531
      %v536 = vadd.f32 %v258, %v533
      %v537 = vld [vmem:[#allocation14] sm:$0x1]
      %v538 = vld [vmem:[#allocation16] sm:$0x1]
      %v539 = vsel %vm278, %v535, 0.0
      %540 = vadd.xlane.f32.xlu0 %v539
      %v541 = vpop.xlane.xlu0 %540
      %v542 = vsel %vm278, %v536, 0.0
      %543 = vadd.xlane.f32.xlu0 %v542
      %v544 = vpop.xlane.xlu0 %543
      %v545 = vrcp.pop 32.0
      %v546 = vmul.f32 32.0, %v545
      %v547 = vsub.f32 1.0, %v546
      %v548 = vmul.f32 %v545, %v547
      %v549 = vadd.f32 %v545, %v548
      %vm550 = vweird.f32 %v545
      %v551 = vsel %vm550, %v545, %v549
      %v552 = vmul.f32 %v541, %v551
      %v553 = vmul.f32 %v544, %v551
      %v554 = vsub.f32 %v535, %v552
      %v555 = vsub.f32 %v536, %v553
      %v556 = vmul.f32 %v554, %v554
      %v557 = vmul.f32 %v555, %v555
      %v558 = vsel %vm278, %v556, 0.0
      %559 = vadd.xlane.f32.xlu0 %v558
      %v560 = vpop.xlane.xlu0 %559
      %v561 = vsel %vm278, %v557, 0.0
      %562 = vadd.xlane.f32.xlu0 %v561
      %v563 = vpop.xlane.xlu0 %562
      %v564 = vmul.f32 %v560, %v551
      %v565 = vmul.f32 %v563, %v551
      %v566 = vadd.f32 %v564, 1e-05
      %v567 = vadd.f32 %v565, 1e-05
      %v568 = vrsqrt.pop %v566
      %v569 = vmul.f32 %v568, %v566
      %v570 = vmul.f32 %v569, %v568
      %v571 = vmul.f32 0.5, %v570
      %v572 = vsub.f32 1.5, %v571
      %v573 = vmul.f32 %v568, %v572
      %vm574 = vweird.f32 %v566
      %vm575 = vweird.f32 %v568
      %vm576 = vmor %vm574, %vm575
      %v577 = vsel %vm576, %v568, %v573
      %v578 = vrsqrt.pop %v567
      %v579 = vmul.f32 %v578, %v567
      %v580 = vmul.f32 %v579, %v578
      %v581 = vmul.f32 0.5, %v580
      %v582 = vsub.f32 1.5, %v581
      %v583 = vmul.f32 %v578, %v582
      %vm584 = vweird.f32 %v567
      %vm585 = vweird.f32 %v578
      %vm586 = vmor %vm584, %vm585
      %v587 = vsel %vm586, %v578, %v583
      %v588 = vmul.f32 %v554, %v577
      %v589 = vmul.f32 %v555, %v587
      %v591 = vperm.slane %v537, 0
      %v593 = vmul.f32 %v588, %v591
      %v594 = vmul.f32 %v589, %v591
      %v596 = vperm.slane %v538, 0
      %v598 = vadd.f32 %v593, %v596
      %v599 = vadd.f32 %v594, %v596
      %v600 = vpack.c.bf16 %v599, %v598
      %v601 = vld [vmem:[%s8] sm:$0xf]
      %v602 = vld [vmem:[%s8 + $0x4] sm:$0xf]
      %v603 = vld [vmem:[%s8 + $0x8] sm:$0xf]
      %v604 = vld [vmem:[%s8 + $0xc] sm:$0xf]
      %v609 = vunpack.c.l.b16 %v601
      %v610 = vunpack.c.l.b16 %v602
      %v611 = vunpack.c.l.b16 %v603
      %v612 = vunpack.c.l.b16 %v604
      %v613 = vpack.c.b16 %v610, %v609
      %v614 = vpack.c.b16 %v612, %v611
      %v618 = vsel %vm278, %v600, 0
      %620 = vmatpush.bf16.msra.mxu0 0
      %621 = vmatpush.bf16.msra.mxu0 0
      %622 = vmatpush.bf16.msra.mxu0 0
      %623 = vmatpush.bf16.msra.mxu0 0
      %624 = vmatpush.bf16.msra.mxu0 0
      %625 = vmatpush.bf16.msra.mxu0 0
      %626 = vmatpush.bf16.msra.mxu0 %v614
      %627 = vmatpush.bf16.msra.mxu0 %v613
      %628 = vmatmul.bf16.gmra.mxu0 %v618
      %v629 = vpop.f32.mrf.mxu0
      %v630 = vadd.f32 0.0, %v629
      %v631 = vpop.f32.mrf.mxu0
      %v632 = vadd.f32 0.0, %v631
      %633 = vdwg.mxu0
      %v634 = vpack.c.bf16 %v630, %v630
      %v635 = vpack.c.bf16 %v632, %v632
      %v636 = vld [vmem:[%s9] sm:$0xf]
      %v637 = vld [vmem:[%s9 + $0x4] sm:$0xf]
      %v638 = vld [vmem:[%s9 + $0x8] sm:$0xf]
      %v639 = vld [vmem:[%s9 + $0xc] sm:$0xf]
      %v642 = vunpack.c.l.b16 %v259
      %v643 = vunpack.c.l.b16 %v260
      %v644 = vpack.c.b16 %v643, %v642
      %v649 = vunpack.c.l.b16 %v636
      %v650 = vunpack.c.l.b16 %v637
      %v651 = vunpack.c.l.b16 %v638
      %v652 = vunpack.c.l.b16 %v639
      %v653 = vpack.c.b16 %v650, %v649
      %v654 = vpack.c.b16 %v652, %v651
      %v658 = vsel %vm278, %v644, 0
      %660 = vmatpush.bf16.msra.mxu0 0
      %661 = vmatpush.bf16.msra.mxu0 0
      %662 = vmatpush.bf16.msra.mxu0 0
      %663 = vmatpush.bf16.msra.mxu0 0
      %664 = vmatpush.bf16.msra.mxu0 0
      %665 = vmatpush.bf16.msra.mxu0 0
      %666 = vmatpush.bf16.msra.mxu0 %v654
      %667 = vmatpush.bf16.msra.mxu0 %v653
      %668 = vmatmul.bf16.gmra.mxu0 %v658
      %v669 = vpop.f32.mrf.mxu0
      %v670 = vadd.f32 0.0, %v669
      %v671 = vpop.f32.mrf.mxu0
      %v672 = vadd.f32 0.0, %v671
      %673 = vdwg.mxu0
      %v674 = vpack.c.bf16 %v670, %v670
      %v675 = vpack.c.bf16 %v672, %v672
      %v676 = vld [vmem:[#allocation11] sm:$0xf]
      %v677 = vld [vmem:[#allocation11 + $0x4] sm:$0xf]
      %v678 = vld [vmem:[#allocation11 + $0x8] sm:$0xf]
      %v679 = vld [vmem:[#allocation11 + $0xc] sm:$0xf]
      %v684 = vunpack.c.l.b16 %v676
      %v685 = vunpack.c.l.b16 %v677
      %v686 = vunpack.c.l.b16 %v678
      %v687 = vunpack.c.l.b16 %v679
      %v688 = vpack.c.b16 %v685, %v684
      %v689 = vpack.c.b16 %v687, %v686
      %692 = vmatpush.bf16.msra.mxu0 0
      %693 = vmatpush.bf16.msra.mxu0 0
      %694 = vmatpush.bf16.msra.mxu0 0
      %695 = vmatpush.bf16.msra.mxu0 0
      %696 = vmatpush.bf16.msra.mxu0 0
      %697 = vmatpush.bf16.msra.mxu0 0
      %698 = vmatpush.bf16.msra.mxu0 %v689
      %699 = vmatpush.bf16.msra.mxu0 %v688
      %700 = vmatmul.bf16.gmra.mxu0 %v658
      %v701 = vpop.f32.mrf.mxu0
      %v702 = vadd.f32 0.0, %v701
      %v703 = vpop.f32.mrf.mxu0
      %v704 = vadd.f32 0.0, %v703
      %705 = vdwg.mxu0
      %v706 = vpack.c.bf16 %v702, %v702
      %v707 = vpack.c.bf16 %v704, %v704
      %v709 = vsel %vm278, %v634, 0
      %v712 = vsel %vm278, %v674, 0
      %714 = vmatpush.bf16.xpose.msra.mxu0 0
      %715 = vmatpush.bf16.xpose.msra.mxu0 0
      %716 = vmatpush.bf16.xpose.msra.mxu0 0
      %717 = vmatpush.bf16.xpose.msra.mxu0 0
      %718 = vmatpush.bf16.xpose.msra.mxu0 0
      %719 = vmatpush.bf16.xpose.msra.mxu0 0
      %720 = vmatpush.bf16.xpose.msra.mxu0 0
      %721 = vmatpush.bf16.xpose.msra.mxu0 %v712
      %722 = vmatmul.bf16.gmra.mxu0 %v709
      %v723 = vpop.f32.mrf.mxu0
      %v724 = vadd.f32 0.0, %v723
      %v725 = vpop.f32.mrf.mxu0
      %726 = vdwg.mxu0
      %v728 = vsel %vm278, %v635, 0
      %v731 = vsel %vm278, %v675, 0
      %733 = vmatpush.bf16.xpose.msra.mxu0 0
      %734 = vmatpush.bf16.xpose.msra.mxu0 0
      %735 = vmatpush.bf16.xpose.msra.mxu0 0
      %736 = vmatpush.bf16.xpose.msra.mxu0 0
      %737 = vmatpush.bf16.xpose.msra.mxu0 0
      %738 = vmatpush.bf16.xpose.msra.mxu0 0
      %739 = vmatpush.bf16.xpose.msra.mxu0 0
      %740 = vmatpush.bf16.xpose.msra.mxu0 %v731
      %741 = vmatmul.bf16.gmra.mxu0 %v728
      %v742 = vpop.f32.mrf.mxu0
      %v743 = vadd.f32 0.0, %v742
      %v744 = vpop.f32.mrf.mxu0
      %745 = vdwg.mxu0
      %v746 = vmul.f32 %v724, 0.17677669
      %v747 = vmul.f32 %v743, 0.17677669
      %v748 = vsel %vm411, %v746, -inf
      %749 = vmax.xlane.f32.xlu0 %v748
      %v750 = vpop.xlane.xlu0 %749
      %v751 = vsel %vm411, %v747, -inf
      %752 = vmax.xlane.f32.xlu0 %v751
      %v753 = vpop.xlane.xlu0 %752
      %v754 = vsub.f32 %v746, %v750
      %v755 = vsub.f32 %v747, %v753
      %v756 = vmul.f32 %v754, 1.442695
      %v757 = vpow.pop %v756
      %v758 = vmul.f32 %v755, 1.442695
      %v759 = vpow.pop %v758
      %v760 = vsel %vm411, %v757, 0.0
      %761 = vadd.xlane.f32.xlu0 %v760
      %v762 = vpop.xlane.xlu0 %761
      %v763 = vsel %vm411, %v759, 0.0
      %764 = vadd.xlane.f32.xlu0 %v763
      %v765 = vpop.xlane.xlu0 %764
      %v766 = vrcp.pop %v762
      %v767 = vmul.f32 %v762, %v766
      %v768 = vsub.f32 1.0, %v767
      %v769 = vmul.f32 %v766, %v768
      %v770 = vadd.f32 %v766, %v769
      %vm771 = vweird.f32 %v762
      %vm772 = vweird.f32 %v766
      %vm773 = vmor %vm771, %vm772
      %v774 = vsel %vm773, %v766, %v770
      %v775 = vand.u32 2147483647, %v762
      %vm776 = vcmp.eq.f32.partialorder %v775, 8.507059e+37
      %v777 = vand.u32 %v762, 2147483648
      %v778 = vor.u32 1.1754944e-38, %v777
      %v779 = vsel %vm776, %v778, %v774
      %v780 = vmul.f32 %v757, %v779
      %v781 = vrcp.pop %v765
      %v782 = vmul.f32 %v765, %v781
      %v783 = vsub.f32 1.0, %v782
      %v784 = vmul.f32 %v781, %v783
      %v785 = vadd.f32 %v781, %v784
      %vm786 = vweird.f32 %v765
      %vm787 = vweird.f32 %v781
      %vm788 = vmor %vm786, %vm787
      %v789 = vsel %vm788, %v781, %v785
      %v790 = vand.u32 2147483647, %v765
      %vm791 = vcmp.eq.f32.partialorder %v790, 8.507059e+37
      %v792 = vand.u32 %v765, 2147483648
      %v793 = vor.u32 1.1754944e-38, %v792
      %v794 = vsel %vm791, %v793, %v789
      %v795 = vmul.f32 %v759, %v794
      %v796 = vpack.c.bf16 %v780, %v780
      %v797 = vpack.c.bf16 %v795, %v795
      %v799 = vsel %vm411, %v796, 0
      %v802 = vsel %vm465, %v706, 0
      %804 = vmatpush.bf16.msra.mxu0 0
      %805 = vmatpush.bf16.msra.mxu0 0
      %806 = vmatpush.bf16.msra.mxu0 0
      %807 = vmatpush.bf16.msra.mxu0 0
      %808 = vmatpush.bf16.msra.mxu0 0
      %809 = vmatpush.bf16.msra.mxu0 0
      %810 = vmatpush.bf16.msra.mxu0 0
      %811 = vmatpush.bf16.msra.mxu0 %v802
      %812 = vmatmul.bf16.gmra.mxu0 %v799
      %v813 = vpop.f32.mrf.mxu0
      %v814 = vadd.f32 0.0, %v813
      %v815 = vpop.f32.mrf.mxu0
      %816 = vdwg.mxu0
      %v818 = vsel %vm411, %v797, 0
      %v821 = vsel %vm465, %v707, 0
      %823 = vmatpush.bf16.msra.mxu0 0
      %824 = vmatpush.bf16.msra.mxu0 0
      %825 = vmatpush.bf16.msra.mxu0 0
      %826 = vmatpush.bf16.msra.mxu0 0
      %827 = vmatpush.bf16.msra.mxu0 0
      %828 = vmatpush.bf16.msra.mxu0 0
      %829 = vmatpush.bf16.msra.mxu0 0
      %830 = vmatpush.bf16.msra.mxu0 %v821
      %831 = vmatmul.bf16.gmra.mxu0 %v818
      %v832 = vpop.f32.mrf.mxu0
      %v833 = vadd.f32 0.0, %v832
      %v834 = vpop.f32.mrf.mxu0
      %835 = vdwg.mxu0
      %v836 = vpack.c.bf16 %v833, %v814
      %v837 = vld [vmem:[#allocation13] sm:$0xf]
      %v838 = vld [vmem:[#allocation13 + $0x4] sm:$0xf]
      %v839 = vld [vmem:[#allocation13 + $0x8] sm:$0xf]
      %v840 = vld [vmem:[#allocation13 + $0xc] sm:$0xf]
      %v845 = vunpack.c.l.b16 %v837
      %v846 = vunpack.c.l.b16 %v838
      %v847 = vunpack.c.l.b16 %v839
      %v848 = vunpack.c.l.b16 %v840
      %v849 = vpack.c.b16 %v846, %v845
      %v850 = vpack.c.b16 %v848, %v847
      %v854 = vsel %vm278, %v836, 0
      %856 = vmatpush.bf16.msra.mxu0 0
      %857 = vmatpush.bf16.msra.mxu0 0
      %858 = vmatpush.bf16.msra.mxu0 0
      %859 = vmatpush.bf16.msra.mxu0 0
      %860 = vmatpush.bf16.msra.mxu0 0
      %861 = vmatpush.bf16.msra.mxu0 0
      %862 = vmatpush.bf16.msra.mxu0 %v850
      %863 = vmatpush.bf16.msra.mxu0 %v849
      %864 = vmatmul.bf16.gmra.mxu0 %v854
      %v865 = vpop.f32.mrf.mxu0
      %v866 = vadd.f32 0.0, %v865
      %v867 = vpop.f32.mrf.mxu0
      %v868 = vadd.f32 0.0, %v867
      %869 = vdwg.mxu0
      %v870 = vadd.f32 %v598, %v866
      %v871 = vadd.f32 %v599, %v868
      %v872 = vld [vmem:[#allocation17] sm:$0x1]
      %v873 = vld [vmem:[#allocation19] sm:$0x1]
      %v874 = vsel %vm278, %v870, 0.0
      %875 = vadd.xlane.f32.xlu0 %v874
      %v876 = vpop.xlane.xlu0 %875
      %v877 = vsel %vm278, %v871, 0.0
      %878 = vadd.xlane.f32.xlu0 %v877
      %v879 = vpop.xlane.xlu0 %878
      %v880 = vmul.f32 %v876, %v551
      %v881 = vmul.f32 %v879, %v551
      %v882 = vsub.f32 %v870, %v880
      %v883 = vsub.f32 %v871, %v881
      %v884 = vmul.f32 %v882, %v882
      %v885 = vmul.f32 %v883, %v883
      %v886 = vsel %vm278, %v884, 0.0
      %887 = vadd.xlane.f32.xlu0 %v886
      %v888 = vpop.xlane.xlu0 %887
      %v889 = vsel %vm278, %v885, 0.0
      %890 = vadd.xlane.f32.xlu0 %v889
      %v891 = vpop.xlane.xlu0 %890
      %v892 = vmul.f32 %v888, %v551
      %v893 = vmul.f32 %v891, %v551
      %v894 = vadd.f32 %v892, 1e-05
      %v895 = vadd.f32 %v893, 1e-05
      %v896 = vrsqrt.pop %v894
      %v897 = vmul.f32 %v896, %v894
      %v898 = vmul.f32 %v897, %v896
      %v899 = vmul.f32 0.5, %v898
      %v900 = vsub.f32 1.5, %v899
      %v901 = vmul.f32 %v896, %v900
      %vm902 = vweird.f32 %v894
      %vm903 = vweird.f32 %v896
      %vm904 = vmor %vm902, %vm903
      %v905 = vsel %vm904, %v896, %v901
      %v906 = vrsqrt.pop %v895
      %v907 = vmul.f32 %v906, %v895
      %v908 = vmul.f32 %v907, %v906
      %v909 = vmul.f32 0.5, %v908
      %v910 = vsub.f32 1.5, %v909
      %v911 = vmul.f32 %v906, %v910
      %vm912 = vweird.f32 %v895
      %vm913 = vweird.f32 %v906
      %vm914 = vmor %vm912, %vm913
      %v915 = vsel %vm914, %v906, %v911
      %v916 = vmul.f32 %v882, %v905
      %v917 = vmul.f32 %v883, %v915
      %v919 = vperm.slane %v872, 0
      %v921 = vmul.f32 %v916, %v919
      %v922 = vmul.f32 %v917, %v919
      %v924 = vperm.slane %v873, 0
      %v926 = vadd.f32 %v921, %v924
      %v927 = vadd.f32 %v922, %v924
      %v928 = vpack.c.bf16 %v927, %v926
      %v929 = vld [vmem:[#allocation23] sm:$0xf]
      %v930 = vld [vmem:[#allocation23 + $0x4] sm:$0xf]
      %v931 = vld [vmem:[#allocation23 + $0x8] sm:$0xf]
      %v932 = vld [vmem:[#allocation23 + $0xc] sm:$0xf]
      %v937 = vunpack.c.l.b16 %v929
      %v938 = vunpack.c.l.b16 %v930
      %v939 = vunpack.c.l.b16 %v931
      %v940 = vunpack.c.l.b16 %v932
      %v941 = vpack.c.b16 %v938, %v937
      %v942 = vpack.c.b16 %v940, %v939
      %v946 = vsel %vm278, %v928, 0
      %948 = vmatpush.bf16.msra.mxu0 0
      %949 = vmatpush.bf16.msra.mxu0 0
      %950 = vmatpush.bf16.msra.mxu0 0
      %951 = vmatpush.bf16.msra.mxu0 0
      %952 = vmatpush.bf16.msra.mxu0 0
      %953 = vmatpush.bf16.msra.mxu0 0
      %954 = vmatpush.bf16.msra.mxu0 %v942
      %955 = vmatpush.bf16.msra.mxu0 %v941
      %956 = vmatmul.bf16.gmra.mxu0 %v946
      %v957 = vpop.f32.mrf.mxu0
      %v958 = vadd.f32 0.0, %v957
      %v959 = vpop.f32.mrf.mxu0
      %v960 = vadd.f32 0.0, %v959
      %961 = vdwg.mxu0
      %v962 = vmax.f32 %v958, 0.0
      %v963 = vmax.f32 %v960, 0.0
      %v964 = vpack.c.bf16 %v963, %v962
      %v965 = vld [vmem:[%s19] sm:$0xf]
      %v966 = vld [vmem:[%s19 + $0x4] sm:$0xf]
      %v967 = vld [vmem:[%s19 + $0x8] sm:$0xf]
      %v968 = vld [vmem:[%s19 + $0xc] sm:$0xf]
      %v969 = vld [vmem:[%s19 + $0x10] sm:$0xf]
      %v970 = vld [vmem:[%s19 + $0x14] sm:$0xf]
      %v971 = vld [vmem:[%s19 + $0x18] sm:$0xf]
      %v972 = vld [vmem:[%s19 + $0x1c] sm:$0xf]
      %v981 = vunpack.c.l.b16 %v965
      %v982 = vunpack.c.l.b16 %v966
      %v983 = vunpack.c.l.b16 %v967
      %v984 = vunpack.c.l.b16 %v968
      %v985 = vunpack.c.l.b16 %v969
      %v986 = vunpack.c.l.b16 %v970
      %v987 = vunpack.c.l.b16 %v971
      %v988 = vunpack.c.l.b16 %v972
      %v989 = vpack.c.b16 %v982, %v981
      %v990 = vpack.c.b16 %v984, %v983
      %v991 = vpack.c.b16 %v986, %v985
      %v992 = vpack.c.b16 %v988, %v987
      %vm997 = vcmask 523264
      %v999 = vsel %vm997, %v964, 0
      %1001 = vmatpush.bf16.msra.mxu0 0
      %1002 = vmatpush.bf16.msra.mxu0 0
      %1003 = vmatpush.bf16.msra.mxu0 0
      %1004 = vmatpush.bf16.msra.mxu0 0
      %1005 = vmatpush.bf16.msra.mxu0 %v992
      %1006 = vmatpush.bf16.msra.mxu0 %v991
      %1007 = vmatpush.bf16.msra.mxu0 %v990
      %1008 = vmatpush.bf16.msra.mxu0 %v989
      %1009 = vmatmul.bf16.gmra.mxu0 %v999
      %v1010 = vpop.f32.mrf.mxu0
      %v1011 = vadd.f32 0.0, %v1010
      %v1012 = vpop.f32.mrf.mxu0
      %v1013 = vadd.f32 0.0, %v1012
      %1014 = vdwg.mxu0
      %v1015 = vadd.f32 %v926, %v1011
      %v1016 = vadd.f32 %v927, %v1013
      %v1017 = vld [vmem:[#allocation20] sm:$0x1]
      %v1018 = vld [vmem:[#allocation22] sm:$0x1]
      %v1019 = vsel %vm278, %v1015, 0.0
      %1020 = vadd.xlane.f32.xlu0 %v1019
      %v1021 = vpop.xlane.xlu0 %1020
      %v1022 = vsel %vm278, %v1016, 0.0
      %1023 = vadd.xlane.f32.xlu0 %v1022
      %v1024 = vpop.xlane.xlu0 %1023
      %v1025 = vmul.f32 %v1021, %v551
      %v1026 = vmul.f32 %v1024, %v551
      %v1027 = vsub.f32 %v1015, %v1025
      %v1028 = vsub.f32 %v1016, %v1026
      %v1029 = vmul.f32 %v1027, %v1027
      %v1030 = vmul.f32 %v1028, %v1028
      %v1031 = vsel %vm278, %v1029, 0.0
      %1032 = vadd.xlane.f32.xlu0 %v1031
      %v1033 = vpop.xlane.xlu0 %1032
      %v1034 = vsel %vm278, %v1030, 0.0
      %1035 = vadd.xlane.f32.xlu0 %v1034
      %v1036 = vpop.xlane.xlu0 %1035
      %v1037 = vmul.f32 %v1033, %v551
      %v1038 = vmul.f32 %v1036, %v551
      %v1039 = vadd.f32 %v1037, 1e-05
      %v1040 = vadd.f32 %v1038, 1e-05
      %v1041 = vrsqrt.pop %v1039
      %v1042 = vmul.f32 %v1041, %v1039
      %v1043 = vmul.f32 %v1042, %v1041
      %v1044 = vmul.f32 0.5, %v1043
      %v1045 = vsub.f32 1.5, %v1044
      %v1046 = vmul.f32 %v1041, %v1045
      %vm1047 = vweird.f32 %v1039
      %vm1048 = vweird.f32 %v1041
      %vm1049 = vmor %vm1047, %vm1048
      %v1050 = vsel %vm1049, %v1041, %v1046
      %v1051 = vrsqrt.pop %v1040
      %v1052 = vmul.f32 %v1051, %v1040
      %v1053 = vmul.f32 %v1052, %v1051
      %v1054 = vmul.f32 0.5, %v1053
      %v1055 = vsub.f32 1.5, %v1054
      %v1056 = vmul.f32 %v1051, %v1055
      %vm1057 = vweird.f32 %v1040
      %vm1058 = vweird.f32 %v1051
      %vm1059 = vmor %vm1057, %vm1058
      %v1060 = vsel %vm1059, %v1051, %v1056
      %v1061 = vmul.f32 %v1027, %v1050
      %v1062 = vmul.f32 %v1028, %v1060
      %v1064 = vperm.slane %v1017, 0
      %v1066 = vmul.f32 %v1061, %v1064
      %v1067 = vmul.f32 %v1062, %v1064
      %v1069 = vperm.slane %v1018, 0
      %v1071 = vadd.f32 %v1066, %v1069
      %v1072 = vadd.f32 %v1067, %v1069
      %v1073 = vpack.c.bf16 %v1071, %v1071
      %v1074 = vpack.c.bf16 %v1072, %v1072
      %vm1075 = vcmask 257024
      %1076 = vst.msk [vmem:[#allocation25] sm:$0xf] %vm1075, %v1073
      %1077 = vst.msk [vmem:[#allocation25 + $0x4] sm:$0xf] %vm1075, %v1074
      %1078 = vst.msk [vmem:[#allocation2] sm:$0xf] %vm1075, %v1073
      %1079 = vst.msk [vmem:[#allocation2 + $0x4] sm:$0xf] %vm1075, %v1074
      %vm1080 = vcmask 7168
      %1081 = vst.msk [vmem:[#allocation3] sm:$0xff] %vm1080, -1e+30
      %1082 = vst.msk [vmem:[#allocation3 + $0x8] sm:$0xff] %vm1080, -1e+30
      %1083 = vst.msk [vmem:[#allocation4] sm:$0xff] %vm1080, 0.0
      %1084 = vst.msk [vmem:[#allocation4 + $0x8] sm:$0xff] %vm1080, 0.0
    $region141: #{tpu_custom_call.1} parent=1 // pred_fallthru
      _
    %v1085 = vld [vmem:[#allocation2] sm:$0xf]
    %v1086 = vld [vmem:[#allocation2 + $0x4] sm:$0xf]
    %v1087 = vld [vmem:[%s20] sm:$0xf]
    %v1088 = vld [vmem:[%s20 + $0x4] sm:$0xf]
    %v1089 = vld [vmem:[%s20 + $0x8] sm:$0xf]
    %v1090 = vld [vmem:[%s20 + $0xc] sm:$0xf]
    %v1091 = vld [vmem:[%s21] sm:$0x1]
    %v1093 = vperm.slane %v1091, 0
    %v1097 = vunpack.c.l.b16 %v1085
    %v1098 = vunpack.c.l.b16 %v1086
    %v1099 = vpack.c.b16 %v1098, %v1097
    %v1104 = vunpack.c.l.b16 %v1087
    %v1105 = vunpack.c.l.b16 %v1088
    %v1106 = vunpack.c.l.b16 %v1089
    %v1107 = vunpack.c.l.b16 %v1090
    %v1108 = vpack.c.b16 %v1105, %v1104
    %v1109 = vpack.c.b16 %v1107, %v1106
    %vm1112 = vcmask 261120
    %v1114 = vsel %vm1112, %v1099, 0
    %1116 = vmatpush.bf16.msra.mxu0 0
    %1117 = vmatpush.bf16.msra.mxu0 0
    %1118 = vmatpush.bf16.msra.mxu0 0
    %1119 = vmatpush.bf16.msra.mxu0 0
    %1120 = vmatpush.bf16.msra.mxu0 0
    %1121 = vmatpush.bf16.msra.mxu0 0
    %1122 = vmatpush.bf16.msra.mxu0 %v1109
    %1123 = vmatpush.bf16.msra.mxu0 %v1108
    %1124 = vmatmul.bf16.gmra.mxu0 %v1114
    %v1125 = vpop.f32.mrf.mxu0
    %v1126 = vadd.f32 %v1093, %v1125
    %v1127 = vpop.f32.mrf.mxu0
    %v1128 = vadd.f32 %v1093, %v1127
    %1129 = vdwg.mxu0
    %v1130 = vld [vmem:[#allocation3] sm:$0xff]
    %v1131 = vld [vmem:[#allocation3 + $0x8] sm:$0xff]
    %vm1132 = vcmask 130048
    %v1133 = vsel %vm1132, %v1126, -inf
    %1134 = vmax.xlane.f32.xlu0 %v1133
    %v1135 = vpop.xlane.xlu0 %1134
    %v1136 = vsel %vm1132, %v1128, -inf
    %1137 = vmax.xlane.f32.xlu0 %v1136
    %v1138 = vpop.xlane.xlu0 %1137
    %v1139 = vmax.f32 %v1130, %v1135
    %v1140 = vmax.f32 %v1131, %v1138
    %1142 = vset.pattern.permute.xlu0 0
    %1143 = vperm.xlu0 %1142, %v1139
    %v1144 = vpop.permute.xlu0 %1143
    %1147 = vset.pattern.permute.xlu0 0
    %1148 = vperm.xlu0 %1147, %v1140
    %v1149 = vpop.permute.xlu0 %1148
    %v1151 = vsub.f32 %v1126, %v1144
    %v1152 = vsub.f32 %v1128, %v1149
    %v1153 = vpack.c.bf16 %v1152, %v1151
    %v1154 = vunpack.c.l.bf16 %v1153
    %v1155 = vunpack.c.h.bf16 %v1153
    %v1156 = vmul.f32 %v1154, 1.442695
    %v1157 = vpow.pop %v1156
    %v1158 = vmul.f32 %v1155, 1.442695
    %v1159 = vpow.pop %v1158
    %v1160 = vpack.c.bf16 %v1159, %v1157
    %v1161 = vunpack.c.l.bf16 %v1160
    %v1162 = vunpack.c.h.bf16 %v1160
    %v1163 = vsel %vm1132, %v1161, 0.0
    %1164 = vadd.xlane.f32.xlu0 %v1163
    %v1165 = vpop.xlane.xlu0 %1164
    %v1166 = vsel %vm1132, %v1162, 0.0
    %1167 = vadd.xlane.f32.xlu0 %v1166
    %v1168 = vpop.xlane.xlu0 %1167
    %v1169 = vld [vmem:[#allocation4] sm:$0xff]
    %v1170 = vld [vmem:[#allocation4 + $0x8] sm:$0xff]
    %v1171 = vsub.f32 %v1130, %v1139
    %v1172 = vsub.f32 %v1131, %v1140
    %v1173 = vmul.f32 %v1171, 1.442695
    %v1174 = vpow.pop %v1173
    %v1175 = vmul.f32 %v1172, 1.442695
    %v1176 = vpow.pop %v1175
    %v1177 = vmul.f32 %v1169, %v1174
    %v1178 = vmul.f32 %v1170, %v1176
    %v1179 = vadd.f32 %v1177, %v1165
    %v1180 = vadd.f32 %v1178, %v1168
    %vm1181 = vcmask 7168
    %1182 = vst.msk [vmem:[#allocation4] sm:$0xff] %vm1181, %v1179
    %1183 = vst.msk [vmem:[#allocation4 + $0x8] sm:$0xff] %vm1181, %v1180
    %1184 = vst.msk [vmem:[#allocation3] sm:$0xff] %vm1181, %v1139
    %1185 = vst.msk [vmem:[#allocation3 + $0x8] sm:$0xff] %vm1181, %v1140
    // Predicated region
    $region142: #{tpu_custom_call.1} parent=1 // pred_check
      %p1186 = pneg %p251
    $region143: #{tpu_custom_call.1} parent=1 // pred_check_branch
      %1188 = sbr.rel (%p1186) target = $region145
    $region144: #{tpu_custom_call.1} parent=1 // pred_region
      %v1189 = vld [vmem:[#allocation2] sm:$0xf]
      %v1190 = vld [vmem:[#allocation2 + $0x4] sm:$0xf]
      %v1191 = vunpack.c.l.bf16 %v1189
      %v1192 = vunpack.c.l.bf16 %v1190
      %v1193 = vld [vmem:[#allocation10] sm:$0xf]
      %v1194 = vld [vmem:[#allocation10 + $0x4] sm:$0xf]
      %v1195 = vunpack.c.l.bf16 %v1193
      %v1196 = vunpack.c.l.bf16 %v1194
      %v1197 = vmul.f32 %v1191, %v1195
      %v1198 = vmul.f32 %v1192, %v1196
      %v1199 = vsel %vm1112, %v1197, 0.0
      %1200 = vadd.xlane.f32.xlu0 %v1199
      %v1201 = vpop.xlane.xlu0 %1200
      %v1202 = vsel %vm1112, %v1198, 0.0
      %1203 = vadd.xlane.f32.xlu0 %v1202
      %v1204 = vpop.xlane.xlu0 %1203
      %v1205 = vld [vmem:[%s3] sm:$0xff]
      %v1206 = vld [vmem:[%s3 + $0x8] sm:$0xff]
      %v1207 = vadd.f32 %v1201, %v1205
      %v1208 = vadd.f32 %v1204, %v1206
      %v1209 = vld [vmem:[#allocation3] sm:$0xff]
      %v1210 = vld [vmem:[#allocation3 + $0x8] sm:$0xff]
      %v1211 = vld [vmem:[#allocation4] sm:$0xff]
      %v1212 = vld [vmem:[#allocation4 + $0x8] sm:$0xff]
      %v1213 = vlog2.pop %v1211
      %v1214 = vmul.f32 %v1213, 0.6931472
      %v1215 = vlog2.pop %v1212
      %v1216 = vmul.f32 %v1215, 0.6931472
      %v1217 = vadd.f32 %v1209, %v1214
      %v1218 = vadd.f32 %v1210, %v1216
      %v1219 = vsub.f32 %v1217, %v1207
      %v1220 = vsub.f32 %v1218, %v1208
      %v1221 = vsel %vm1181, %v1219, 0.0
      %v1222 = vsel %vm1181, %v1220, 0.0
      %v1223 = vadd.f32 %v1221, %v1222
      %1224 = vadd.xlane.f32.xlu0 %v1223
      %v1225 = vpop.xlane.xlu0 %1224
      %v1226 = vrot.slane %v1225, 4
      %v1227 = vadd.f32 %v1225, %v1226
      %v1228 = vrot.slane %v1227, 2
      %v1229 = vadd.f32 %v1227, %v1228
      %v1230 = vrot.slane %v1229, 1
      %v1231 = vadd.f32 %v1229, %v1230
      %s1232 = vtos %v1231
      %v1233 = vstv %s1232
      %1234 = vst [vmem:[#allocation26] sm:$0x1] %v1233
    $region145: #{tpu_custom_call.1} parent=1 // pred_fallthru
      _
    // Predicated region
    $region146: #{tpu_custom_call.1} parent=1 // pred_check
      _
    $region147: #{tpu_custom_call.1} parent=1 // pred_check_branch
      %1236 = sbr.rel (0) target = $region149
    $region148: #{tpu_custom_call.1} parent=1 // pred_region
      %1238 = vsyncadd [#allocation7], 0
      %s1239 = sshll.u32 [#allocation25], 4
      %s1240 = int_to_ptr.vmem [resolvable:$true] %s1239
      %s1241 = sshll.u32 %s22, 4
      %s1242 = int_to_ptr.hbm [resolvable:$true] %s1241
      %1247 = dma.vmem_to_hbm [thread:$0]  %s1240, 128, %s1242, [#allocation7], 64, 64, 4
    $region149: #{tpu_custom_call.1} parent=1 // pred_fallthru
      _
    // Predicated region
    $region150: #{tpu_custom_call.1} parent=1 // pred_check
      _
    $region151: #{tpu_custom_call.1} parent=1 // pred_check_branch
      %1249 = sbr.rel (0) target = $region153
    $region152: #{tpu_custom_call.1} parent=1 // pred_region
      %1251 = vsyncadd [#allocation27], 0
      %s1253 = sshll.u32 [#allocation26], 4
      %s1254 = int_to_ptr.vmem [resolvable:$true] %s1253
      %s1255 = sshll.u32 %s23, 4
      %s1256 = int_to_ptr.hbm [resolvable:$true] %s1255
      %1258 = dma.vmem_to_hbm [thread:$0]  %s1254, 16, %s1256, [#allocation27]
    $region153: #{tpu_custom_call.1} parent=1 // pred_fallthru
      _
    // Predicated region
    $region154: #{tpu_custom_call.1} parent=1 // pred_check
      _
    $region155: #{tpu_custom_call.1} parent=1 // pred_check_branch
      %1260 = sbr.rel (0) target = $region157
    $region156: #{tpu_custom_call.1} parent=1 // pred_region
      %1262 = dma.done [#allocation7], 128
    $region157: #{tpu_custom_call.1} parent=1 // pred_fallthru
      _
    // Predicated region
    $region158: #{tpu_custom_call.1} parent=1 // pred_check
      _
    $region159: #{tpu_custom_call.1} parent=1 // pred_check_branch
      %1264 = sbr.rel (0) target = $region161
    $region160: #{tpu_custom_call.1} parent=1 // pred_region
      %1266 = dma.done [#allocation27], 16
    $region161: #{tpu_custom_call.1} parent=1 // pred_fallthru
      _
    %1267 = vsyncpa [#allocation6], 1
    %1268 = vsyncpa [#allocation9], 1
    %1269 = vsyncpa [#allocation12], 1
    %1270 = vsyncpa [#allocation15], 1
    %1271 = vsyncpa [#allocation18], 1
    %1272 = vsyncpa [#allocation21], 1
    %1273 = vsyncpa [#allocation24], 1
    %1274 = vsyncpa [#allocation7], 1
    %1275 = vsyncpa [#allocation27], 1

</llo_original>
